<compile_context>
chip_gen: v7x
topology: tpu7x:2x2x1
jax: 0.10.0
libtpu: 0.0.40
codegen_flags: <defaults>
</compile_context>

<pallas_src>
import functools

import jax
import jax.numpy as jnp
from jax.experimental import pallas as pl
from jax.experimental.pallas import tpu as pltpu

LN_EPS = 1e-5  # nn.LayerNorm default


def _gelu_exact(x):
    # nn.GELU() default (approximate='none'): 0.5*x*(1+erf(x/sqrt(2)))
    return 0.5 * x * (1.0 + jax.lax.erf(x * jnp.float32(0.7071067811865476)))


def _gelu_tanh(x):
    # tanh-approximate GELU (EUP path); only used when tanh_gelu=True.
    c = jnp.float32(0.7978845608028654)  # sqrt(2/pi)
    return 0.5 * x * (1.0 + jnp.tanh(c * (x + jnp.float32(0.044715) * x * x * x)))


def _layernorm(x, w, b):
    mu = jnp.mean(x, axis=-1, keepdims=True)
    var = jnp.mean(jnp.square(x - mu), axis=-1, keepdims=True)
    return (x - mu) * jax.lax.rsqrt(var + LN_EPS) * w + b


def _to_token_major(x3, block_b, T, F):
    """(block_b, T, F) -> (T, block_b*F).

    Each x3[b] is a (T, F=128) tile-aligned slab with tokens already on the
    sublane (contraction) axis, so placing the slabs side by side along the
    lane axis is a cheap VMEM relayout.  This lets the token-mixing conv run
    as ONE (T, T) @ (T, block_b*F) MXU op for the whole batch slab.
    """
    if block_b == 1:
        return x3.reshape(T, F)
    return jnp.concatenate([x3[b] for b in range(block_b)], axis=1)


def _to_batch_major(xw, block_b, T, F):
    """(T, block_b*F) -> (block_b*T, F), rows ordered (b, t)."""
    if block_b == 1:
        return xw
    return jnp.concatenate(
        [xw[:, b * F:(b + 1) * F] for b in range(block_b)], axis=0)


def mixer_block_kernel(
    x_ref,                               # (block_b, T, F) f32
    ln_seq_w_ref, ln_seq_b_ref,          # (1, F) f32
    conv_w0_ref, conv_w1_ref,            # (T, T) matmul_dtype, pre-masked (tril)
    ln_pat_w_ref, ln_pat_b_ref,          # (1, F) f32
    ff_w1_ref, ff_b1_ref,                # (F, Fi) matmul_dtype, (1, Fi) f32
    ff_w2_ref, ff_b2_ref,                # (Fi, F) matmul_dtype, (1, F) f32
    o_ref,                               # (block_b, T, F)
    *, matmul_dtype, tanh_gelu,
):
    block_b, T, F = x_ref.shape
    BT = block_b * T
    gelu = _gelu_tanh if tanh_gelu else _gelu_exact

    # Lane-dense 2-D working slab; rows ordered (b, t) (free reshape).
    x2d = x_ref[...].astype(jnp.float32).reshape(BT, F)

    # --- token-mixing branch (seq_layernorm -> conv -> GELU -> conv) ---------
    residual = x2d
    xn = _layernorm(x2d, ln_seq_w_ref[0], ln_seq_b_ref[0]).astype(matmul_dtype)
    # One wide matmul per conv over the whole batch slab (N = block_b*128 lanes)
    # instead of 2*block_b tiny K=T matmuls.
    xt = _to_token_major(xn.reshape(block_b, T, F), block_b, T, F)
    h = jnp.dot(conv_w0_ref[...], xt, preferred_element_type=jnp.float32)
    h = gelu(h).astype(matmul_dtype)
    h = jnp.dot(conv_w1_ref[...], h, preferred_element_type=jnp.float32)
    x2d = _to_batch_major(h, block_b, T, F) + residual

    # --- channel MLP branch (patch_layernorm -> Linear -> GELU -> Linear) ----
    residual = x2d
    xn = _layernorm(x2d, ln_pat_w_ref[0], ln_pat_b_ref[0]).astype(matmul_dtype)
    f = jnp.dot(xn, ff_w1_ref[...], preferred_element_type=jnp.float32) + ff_b1_ref[0]
    f = gelu(f).astype(matmul_dtype)
    f = jnp.dot(f, ff_w2_ref[...], preferred_element_type=jnp.float32) + ff_b2_ref[0]
    x2d = f + residual

    o_ref[...] = x2d.reshape(block_b, T, F).astype(o_ref.dtype)


def _num_tensorcores():
    try:
        dev = jax.devices()[0]
        for attr in ("num_cores", "core_count"):
            n = getattr(dev, attr, None)
            if n:
                return max(1, int(n))
    except Exception:
        pass
    return 1


def _vmem_capacity_bytes():
    try:
        return int(pltpu.get_tpu_info().vmem_capacity_bytes)
    except Exception:
        return 64 * 1024 * 1024  # conservative (v7x-sized) fallback


def _pick_block_b(B, T, F, Fi, *, num_cores=1, target_bytes=12 << 20,
                  min_rows_per_core=256, max_rows=2048):
    """Batch-block size: maximize MXU rows (block_b*T) within a VMEM activation
    budget and minimize grid steps (the grid is a serial loop on 1-TC chips).
    Only split across TensorCores when every core still gets >= 256 rows."""
    per_item = T * (4 * F + 3 * Fi) * 4        # rough f32 working set / batch item
    divisors = [d for d in range(1, B + 1) if B % d == 0]
    fitting = [d for d in divisors
               if d * per_item <= target_bytes and d * T <= max_rows] or [1]
    if num_cores > 1:
        split = [d for d in fitting
                 if (B // d) % num_cores == 0 and d * T >= min_rows_per_core]
        if split:
            return max(split)
    return max(fitting)


def mixer_block(x, params, *, block_b=None, matmul_dtype=jnp.bfloat16,
                tanh_gelu=False, single_buffer_weights=True):
    """x: (B, T, F) float32.  params: dict of weights (PyTorch conventions)."""
    B, T, F = x.shape
    Fi = params["ff_w1"].shape[0]  # inner ff dim = 4*F

    if block_b is None:
        block_b = _pick_block_b(B, T, F, Fi, num_cores=_num_tensorcores())
    assert B % block_b == 0, "batch must be divisible by block_b"
    nb = B // block_b

    # --- parameter prep (glue, plain JAX) -------------------------------------
    # Causal (tril) mask fused into the dtype cast that is needed anyway:
    # zero extra HBM passes, zero per-grid-step masking work in the kernel.
    tril = jnp.tril(jnp.ones((T, T), jnp.float32))
    conv_w0 = (params["conv_w0"] * tril).astype(matmul_dtype)    # (T, T)
    conv_w1 = (params["conv_w1"] * tril).astype(matmul_dtype)    # (T, T)
    # nn.Linear stores (out, in) and computes x @ W.T + b -> pass W.T.
    ff_w1 = params["ff_w1"].T.astype(matmul_dtype)               # (F, Fi)
    ff_w2 = params["ff_w2"].T.astype(matmul_dtype)               # (Fi, F)
    ff_b1 = params["ff_b1"].reshape(1, Fi).astype(jnp.float32)
    ff_b2 = params["ff_b2"].reshape(1, F).astype(jnp.float32)
    ln_seq_w = params["ln_seq_w"].reshape(1, F).astype(jnp.float32)
    ln_seq_b = params["ln_seq_b"].reshape(1, F).astype(jnp.float32)
    ln_pat_w = params["ln_pat_w"].reshape(1, F).astype(jnp.float32)
    ln_pat_b = params["ln_pat_b"].reshape(1, F).astype(jnp.float32)

    # --- VMEM budget & cost hint ----------------------------------------------
    wbytes = jnp.dtype(matmul_dtype).itemsize
    weight_bytes = (2 * T * T + 2 * F * Fi) * wbytes + (Fi + 5 * F) * 4
    act_bytes = block_b * T * F * 4
    hidden_bytes = block_b * T * Fi * 4
    needed = 2 * weight_bytes + 6 * act_bytes + 4 * hidden_bytes + (4 << 20)
    budget = max(int(0.80 * _vmem_capacity_bytes()), 32 << 20)  # compiler headroom
    vmem_limit = int(min(max(needed, 32 << 20), budget))

    flops = 4 * B * T * F * (T + Fi)                # 2 conv + 2 FF matmuls
    transcendentals = B * T * (F + Fi)              # two GELUs
    bytes_accessed = int(2 * B * T * F * 4 + weight_bytes)  # weights DMA'd once
    cost = pl.CostEstimate(flops=int(flops), transcendentals=int(transcendentals),
                           bytes_accessed=bytes_accessed)

    def wspec(shape):
        kwargs = {}
        if single_buffer_weights and hasattr(pl, "Buffered"):
            # Constant-index blocks are never re-DMA'd after step 0; don't pay
            # for a second VMEM buffer.
            kwargs["pipeline_mode"] = pl.Buffered(1)
        return pl.BlockSpec(shape, lambda i, _n=len(shape): (0,) * _n, **kwargs)

    grid_spec = pltpu.PrefetchScalarGridSpec(
        num_scalar_prefetch=0,
        grid=(nb,),
        in_specs=[
            pl.BlockSpec((block_b, T, F), lambda i: (i, 0, 0)),   # x slab
            wspec((1, F)), wspec((1, F)),                         # seq LN w, b
            wspec((T, T)), wspec((T, T)),                         # conv w0, w1
            wspec((1, F)), wspec((1, F)),                         # patch LN w, b
            wspec((F, Fi)), wspec((1, Fi)),                       # ff w1, b1
            wspec((Fi, F)), wspec((1, F)),                        # ff w2, b2
        ],
        out_specs=pl.BlockSpec((block_b, T, F), lambda i: (i, 0, 0)),
    )

    kernel = functools.partial(mixer_block_kernel, matmul_dtype=matmul_dtype,
                               tanh_gelu=tanh_gelu)

    return pl.pallas_call(
        kernel,
        out_shape=jax.ShapeDtypeStruct((B, T, F), x.dtype),
        grid_spec=grid_spec,
        compiler_params=pltpu.CompilerParams(
            dimension_semantics=("parallel",),
            vmem_limit_bytes=vmem_limit,
        ),
        cost_estimate=cost,
    )(x, ln_seq_w, ln_seq_b, conv_w0, conv_w1,
      ln_pat_w, ln_pat_b, ff_w1, ff_b1, ff_w2, ff_b2)


def mixer_block_ref(x, params):
    """Pure-JAX f32 reference mirroring the PyTorch forward."""
    B, T, F = x.shape
    tril = jnp.tril(jnp.ones((T, T), jnp.float32))
    w0 = params["conv_w0"] * tril
    w1 = params["conv_w1"] * tril

    def ln(v, w, b):
        mu = jnp.mean(v, axis=-1, keepdims=True)
        var = jnp.mean(jnp.square(v - mu), axis=-1, keepdims=True)
        return (v - mu) / jnp.sqrt(var + LN_EPS) * w + b

    res = x
    h = ln(x, params["ln_seq_w"], params["ln_seq_b"])
    h = jnp.einsum("ot,btf->bof", w0, h)
    h = _gelu_exact(h)
    h = jnp.einsum("ot,btf->bof", w1, h)
    x = h + res
    res = x
    h = ln(x, params["ln_pat_w"], params["ln_pat_b"])
    h = _gelu_exact(h @ params["ff_w1"].T + params["ff_b1"])
    h = h @ params["ff_w2"].T + params["ff_b2"]
    return h + res


def make_params(key, dim, length):
    ks = jax.random.split(key, 6)
    Fi = 4 * dim
    return {
        "ln_seq_w": jnp.ones((dim,), jnp.float32),
        "ln_seq_b": jnp.zeros((dim,), jnp.float32),
        "ln_pat_w": jnp.ones((dim,), jnp.float32),
        "ln_pat_b": jnp.zeros((dim,), jnp.float32),
        # ConvForward(length, expansion_factor=1): two Conv1d(length, length, 1, bias=False)
        "conv_w0": 0.1 * jax.random.normal(ks[0], (length, length), jnp.float32),
        "conv_w1": 0.1 * jax.random.normal(ks[1], (length, length), jnp.float32),
        # FeedForward(dim, 4): Linear(dim, 4*dim), Linear(4*dim, dim) (PyTorch (out, in))
        "ff_w1": 0.1 * jax.random.normal(ks[2], (4 * dim, dim), jnp.float32),
        "ff_b1": 0.01 * jax.random.normal(ks[3], (4 * dim,), jnp.float32),
        "ff_w2": 0.1 * jax.random.normal(ks[4], (dim, 4 * dim), jnp.float32),
        "ff_b2": 0.01 * jax.random.normal(ks[5], (dim,), jnp.float32),
    }


if __name__ == "__main__":
    # batch, length (tokens), dim=128 (module spec) -> lane-dense F, M=B*T=128.
    B, T, F = 8, 16, 128
    key = jax.random.PRNGKey(0)
    kx, kp = jax.random.split(key)
    x = jax.random.normal(kx, (B, T, F), jnp.float32)
    params = make_params(kp, F, T)

    ref = mixer_block_ref(x, params)

    # Exact-semantics path (f32 MXU): tight check.
    out_f32 = jax.block_until_ready(mixer_block(x, params, matmul_dtype=jnp.float32))
    assert out_f32.shape == (B, T, F)
    assert jnp.allclose(out_f32, ref, atol=1e-4, rtol=1e-4), "f32 mismatch vs reference"

    # Performance path (default bf16 MXU inputs, f32 accumulation): looser check.
    out_bf16 = jax.block_until_ready(mixer_block(x, params))
    assert out_bf16.shape == (B, T, F)
    assert jnp.allclose(out_bf16, ref, atol=5e-2, rtol=5e-2), "bf16 mismatch vs reference"

    print("KERNEL_OK")
</pallas_src>

<mosaic_0001>
module attributes {stable_mosaic.version = 11 : i64} {
  func.func @mixer_block_kernel(%arg0: i32, %arg1: memref<8x16x128xf32, #tpu.memory_space<vmem>>, %arg2: memref<1x128xf32, #tpu.memory_space<vmem>>, %arg3: memref<1x128xf32, #tpu.memory_space<vmem>>, %arg4: memref<16x16xf32, #tpu.memory_space<vmem>>, %arg5: memref<16x16xf32, #tpu.memory_space<vmem>>, %arg6: memref<1x128xf32, #tpu.memory_space<vmem>>, %arg7: memref<1x128xf32, #tpu.memory_space<vmem>>, %arg8: memref<128x512xf32, #tpu.memory_space<vmem>>, %arg9: memref<1x512xf32, #tpu.memory_space<vmem>>, %arg10: memref<512x128xf32, #tpu.memory_space<vmem>>, %arg11: memref<1x128xf32, #tpu.memory_space<vmem>>, %arg12: memref<8x16x128xf32, #tpu.memory_space<vmem>>) attributes {dimension_semantics = [#tpu.dimension_semantics<parallel>], iteration_bounds = array<i64: 1>, scalar_prefetch = 0 : i64, scratch_operands = 0 : i64, tpu.core_type = #tpu.core_type<tc>, window_params = [{transform_indices = @transform_0, window_bounds = array<i64: 8, 16, 128>}, {pipeline_mode = #tpu.pipeline_mode<synchronous>, transform_indices = @transform_1, window_bounds = array<i64: 1, 128>}, {pipeline_mode = #tpu.pipeline_mode<synchronous>, transform_indices = @transform_2, window_bounds = array<i64: 1, 128>}, {pipeline_mode = #tpu.pipeline_mode<synchronous>, transform_indices = @transform_3, window_bounds = array<i64: 16, 16>}, {pipeline_mode = #tpu.pipeline_mode<synchronous>, transform_indices = @transform_4, window_bounds = array<i64: 16, 16>}, {pipeline_mode = #tpu.pipeline_mode<synchronous>, transform_indices = @transform_5, window_bounds = array<i64: 1, 128>}, {pipeline_mode = #tpu.pipeline_mode<synchronous>, transform_indices = @transform_6, window_bounds = array<i64: 1, 128>}, {pipeline_mode = #tpu.pipeline_mode<synchronous>, transform_indices = @transform_7, window_bounds = array<i64: 128, 512>}, {pipeline_mode = #tpu.pipeline_mode<synchronous>, transform_indices = @transform_8, window_bounds = array<i64: 1, 512>}, {pipeline_mode = #tpu.pipeline_mode<synchronous>, transform_indices = @transform_9, window_bounds = array<i64: 512, 128>}, {pipeline_mode = #tpu.pipeline_mode<synchronous>, transform_indices = @transform_10, window_bounds = array<i64: 1, 128>}, {transform_indices = @transform_11, window_bounds = array<i64: 8, 16, 128>}]} {
    %c0 = arith.constant 0 : index
    %c0_0 = arith.constant 0 : index
    %c0_1 = arith.constant 0 : index
    %0 = vector.load %arg1[%c0, %c0_0, %c0_1] : memref<8x16x128xf32, #tpu.memory_space<vmem>>, vector<8x16x128xf32>
    %1 = vector.shape_cast %0 : vector<8x16x128xf32> to vector<128x128xf32>
    %c0_2 = arith.constant 0 : index
    %c0_3 = arith.constant 0 : index
    %2 = vector.load %arg2[%c0_2, %c0_3] : memref<1x128xf32, #tpu.memory_space<vmem>>, vector<1x128xf32>
    %3 = vector.shape_cast %2 : vector<1x128xf32> to vector<128xf32>
    %c0_4 = arith.constant 0 : index
    %c0_5 = arith.constant 0 : index
    %4 = vector.load %arg3[%c0_4, %c0_5] : memref<1x128xf32, #tpu.memory_space<vmem>>, vector<1x128xf32>
    %5 = vector.shape_cast %4 : vector<1x128xf32> to vector<128xf32>
    %cst = arith.constant dense<0.000000e+00> : vector<128xf32>
    %6 = vector.multi_reduction <add>, %1, %cst [1] : vector<128x128xf32> to vector<128xf32>
    %7 = vector.shape_cast %6 : vector<128xf32> to vector<128x1xf32>
    %cst_6 = arith.constant 1.280000e+02 : f32
    %8 = vector.broadcast %cst_6 : f32 to vector<128x1xf32>
    %9 = arith.divf %7, %8 : vector<128x1xf32>
    %10 = vector.broadcast %9 : vector<128x1xf32> to vector<128x128xf32>
    %11 = arith.subf %1, %10 : vector<128x128xf32>
    %12 = arith.mulf %11, %11 : vector<128x128xf32>
    %cst_7 = arith.constant dense<0.000000e+00> : vector<128xf32>
    %13 = vector.multi_reduction <add>, %12, %cst_7 [1] : vector<128x128xf32> to vector<128xf32>
    %14 = vector.shape_cast %13 : vector<128xf32> to vector<128x1xf32>
    %cst_8 = arith.constant 1.280000e+02 : f32
    %15 = vector.broadcast %cst_8 : f32 to vector<128x1xf32>
    %16 = arith.divf %14, %15 : vector<128x1xf32>
    %17 = vector.broadcast %9 : vector<128x1xf32> to vector<128x128xf32>
    %18 = arith.subf %1, %17 : vector<128x128xf32>
    %cst_9 = arith.constant 9.99999974E-6 : f32
    %19 = vector.broadcast %cst_9 : f32 to vector<128x1xf32>
    %20 = arith.addf %16, %19 : vector<128x1xf32>
    %21 = math.rsqrt %20 : vector<128x1xf32>
    %22 = vector.broadcast %21 : vector<128x1xf32> to vector<128x128xf32>
    %23 = arith.mulf %18, %22 : vector<128x128xf32>
    %24 = vector.shape_cast %3 : vector<128xf32> to vector<1x128xf32>
    %25 = vector.broadcast %24 : vector<1x128xf32> to vector<128x128xf32>
    %26 = arith.mulf %23, %25 : vector<128x128xf32>
    %27 = vector.shape_cast %5 : vector<128xf32> to vector<1x128xf32>
    %28 = vector.broadcast %27 : vector<1x128xf32> to vector<128x128xf32>
    %29 = arith.addf %26, %28 : vector<128x128xf32>
    %30 = vector.shape_cast %29 : vector<128x128xf32> to vector<8x16x128xf32>
    %31 = vector.extract_strided_slice %30 {offsets = [0, 0, 0], sizes = [1, 16, 128], strides = [1, 1, 1]} : vector<8x16x128xf32> to vector<1x16x128xf32>
    %32 = vector.shape_cast %31 : vector<1x16x128xf32> to vector<16x128xf32>
    %33 = vector.extract_strided_slice %30 {offsets = [1, 0, 0], sizes = [1, 16, 128], strides = [1, 1, 1]} : vector<8x16x128xf32> to vector<1x16x128xf32>
    %34 = vector.shape_cast %33 : vector<1x16x128xf32> to vector<16x128xf32>
    %35 = vector.extract_strided_slice %30 {offsets = [2, 0, 0], sizes = [1, 16, 128], strides = [1, 1, 1]} : vector<8x16x128xf32> to vector<1x16x128xf32>
    %36 = vector.shape_cast %35 : vector<1x16x128xf32> to vector<16x128xf32>
    %37 = vector.extract_strided_slice %30 {offsets = [3, 0, 0], sizes = [1, 16, 128], strides = [1, 1, 1]} : vector<8x16x128xf32> to vector<1x16x128xf32>
    %38 = vector.shape_cast %37 : vector<1x16x128xf32> to vector<16x128xf32>
    %39 = vector.extract_strided_slice %30 {offsets = [4, 0, 0], sizes = [1, 16, 128], strides = [1, 1, 1]} : vector<8x16x128xf32> to vector<1x16x128xf32>
    %40 = vector.shape_cast %39 : vector<1x16x128xf32> to vector<16x128xf32>
    %41 = vector.extract_strided_slice %30 {offsets = [5, 0, 0], sizes = [1, 16, 128], strides = [1, 1, 1]} : vector<8x16x128xf32> to vector<1x16x128xf32>
    %42 = vector.shape_cast %41 : vector<1x16x128xf32> to vector<16x128xf32>
    %43 = vector.extract_strided_slice %30 {offsets = [6, 0, 0], sizes = [1, 16, 128], strides = [1, 1, 1]} : vector<8x16x128xf32> to vector<1x16x128xf32>
    %44 = vector.shape_cast %43 : vector<1x16x128xf32> to vector<16x128xf32>
    %45 = vector.extract_strided_slice %30 {offsets = [7, 0, 0], sizes = [1, 16, 128], strides = [1, 1, 1]} : vector<8x16x128xf32> to vector<1x16x128xf32>
    %46 = vector.shape_cast %45 : vector<1x16x128xf32> to vector<16x128xf32>
    %47 = tpu.concatenate %32, %34, %36, %38, %40, %42, %44, %46 in 1 : vector<16x128xf32>, vector<16x128xf32>, vector<16x128xf32>, vector<16x128xf32>, vector<16x128xf32>, vector<16x128xf32>, vector<16x128xf32>, vector<16x128xf32> -> vector<16x1024xf32>
    %c0_10 = arith.constant 0 : index
    %c0_11 = arith.constant 0 : index
    %48 = vector.load %arg4[%c0_10, %c0_11] : memref<16x16xf32, #tpu.memory_space<vmem>>, vector<16x16xf32>
    %cst_12 = arith.constant dense<0.000000e+00> : vector<16x1024xf32>
    %49 = tpu.matmul %48, %47, %cst_12 {dimension_numbers = #tpu.dot_dimension_numbers<[1], [0], [0], [1], [0, 0, 1, 1], [], []>} : vector<16x16xf32>, vector<16x1024xf32>, vector<16x1024xf32> -> vector<16x1024xf32>
    %cst_13 = arith.constant 5.000000e-01 : f32
    %50 = vector.broadcast %cst_13 : f32 to vector<16x1024xf32>
    %51 = arith.mulf %50, %49 : vector<16x1024xf32>
    %cst_14 = arith.constant 0.707106769 : f32
    %52 = vector.broadcast %cst_14 : f32 to vector<16x1024xf32>
    %53 = arith.mulf %49, %52 : vector<16x1024xf32>
    %54 = math.erf %53 : vector<16x1024xf32>
    %cst_15 = arith.constant 1.000000e+00 : f32
    %55 = vector.broadcast %cst_15 : f32 to vector<16x1024xf32>
    %56 = arith.addf %55, %54 : vector<16x1024xf32>
    %57 = arith.mulf %51, %56 : vector<16x1024xf32>
    %c0_16 = arith.constant 0 : index
    %c0_17 = arith.constant 0 : index
    %58 = vector.load %arg5[%c0_16, %c0_17] : memref<16x16xf32, #tpu.memory_space<vmem>>, vector<16x16xf32>
    %cst_18 = arith.constant dense<0.000000e+00> : vector<16x1024xf32>
    %59 = tpu.matmul %58, %57, %cst_18 {dimension_numbers = #tpu.dot_dimension_numbers<[1], [0], [0], [1], [0, 0, 1, 1], [], []>} : vector<16x16xf32>, vector<16x1024xf32>, vector<16x1024xf32> -> vector<16x1024xf32>
    %60 = vector.extract_strided_slice %59 {offsets = [0, 0], sizes = [16, 128], strides = [1, 1]} : vector<16x1024xf32> to vector<16x128xf32>
    %61 = vector.extract_strided_slice %59 {offsets = [0, 128], sizes = [16, 128], strides = [1, 1]} : vector<16x1024xf32> to vector<16x128xf32>
    %62 = vector.extract_strided_slice %59 {offsets = [0, 256], sizes = [16, 128], strides = [1, 1]} : vector<16x1024xf32> to vector<16x128xf32>
    %63 = vector.extract_strided_slice %59 {offsets = [0, 384], sizes = [16, 128], strides = [1, 1]} : vector<16x1024xf32> to vector<16x128xf32>
    %64 = vector.extract_strided_slice %59 {offsets = [0, 512], sizes = [16, 128], strides = [1, 1]} : vector<16x1024xf32> to vector<16x128xf32>
    %65 = vector.extract_strided_slice %59 {offsets = [0, 640], sizes = [16, 128], strides = [1, 1]} : vector<16x1024xf32> to vector<16x128xf32>
    %66 = vector.extract_strided_slice %59 {offsets = [0, 768], sizes = [16, 128], strides = [1, 1]} : vector<16x1024xf32> to vector<16x128xf32>
    %67 = vector.extract_strided_slice %59 {offsets = [0, 896], sizes = [16, 128], strides = [1, 1]} : vector<16x1024xf32> to vector<16x128xf32>
    %68 = tpu.concatenate %60, %61, %62, %63, %64, %65, %66, %67 in 0 : vector<16x128xf32>, vector<16x128xf32>, vector<16x128xf32>, vector<16x128xf32>, vector<16x128xf32>, vector<16x128xf32>, vector<16x128xf32>, vector<16x128xf32> -> vector<128x128xf32>
    %69 = arith.addf %68, %1 : vector<128x128xf32>
    %c0_19 = arith.constant 0 : index
    %c0_20 = arith.constant 0 : index
    %70 = vector.load %arg6[%c0_19, %c0_20] : memref<1x128xf32, #tpu.memory_space<vmem>>, vector<1x128xf32>
    %71 = vector.shape_cast %70 : vector<1x128xf32> to vector<128xf32>
    %c0_21 = arith.constant 0 : index
    %c0_22 = arith.constant 0 : index
    %72 = vector.load %arg7[%c0_21, %c0_22] : memref<1x128xf32, #tpu.memory_space<vmem>>, vector<1x128xf32>
    %73 = vector.shape_cast %72 : vector<1x128xf32> to vector<128xf32>
    %cst_23 = arith.constant dense<0.000000e+00> : vector<128xf32>
    %74 = vector.multi_reduction <add>, %69, %cst_23 [1] : vector<128x128xf32> to vector<128xf32>
    %75 = vector.shape_cast %74 : vector<128xf32> to vector<128x1xf32>
    %cst_24 = arith.constant 1.280000e+02 : f32
    %76 = vector.broadcast %cst_24 : f32 to vector<128x1xf32>
    %77 = arith.divf %75, %76 : vector<128x1xf32>
    %78 = vector.broadcast %77 : vector<128x1xf32> to vector<128x128xf32>
    %79 = arith.subf %69, %78 : vector<128x128xf32>
    %80 = arith.mulf %79, %79 : vector<128x128xf32>
    %cst_25 = arith.constant dense<0.000000e+00> : vector<128xf32>
    %81 = vector.multi_reduction <add>, %80, %cst_25 [1] : vector<128x128xf32> to vector<128xf32>
    %82 = vector.shape_cast %81 : vector<128xf32> to vector<128x1xf32>
    %cst_26 = arith.constant 1.280000e+02 : f32
    %83 = vector.broadcast %cst_26 : f32 to vector<128x1xf32>
    %84 = arith.divf %82, %83 : vector<128x1xf32>
    %85 = vector.broadcast %77 : vector<128x1xf32> to vector<128x128xf32>
    %86 = arith.subf %69, %85 : vector<128x128xf32>
    %cst_27 = arith.constant 9.99999974E-6 : f32
    %87 = vector.broadcast %cst_27 : f32 to vector<128x1xf32>
    %88 = arith.addf %84, %87 : vector<128x1xf32>
    %89 = math.rsqrt %88 : vector<128x1xf32>
    %90 = vector.broadcast %89 : vector<128x1xf32> to vector<128x128xf32>
    %91 = arith.mulf %86, %90 : vector<128x128xf32>
    %92 = vector.shape_cast %71 : vector<128xf32> to vector<1x128xf32>
    %93 = vector.broadcast %92 : vector<1x128xf32> to vector<128x128xf32>
    %94 = arith.mulf %91, %93 : vector<128x128xf32>
    %95 = vector.shape_cast %73 : vector<128xf32> to vector<1x128xf32>
    %96 = vector.broadcast %95 : vector<1x128xf32> to vector<128x128xf32>
    %97 = arith.addf %94, %96 : vector<128x128xf32>
    %c0_28 = arith.constant 0 : index
    %c0_29 = arith.constant 0 : index
    %98 = vector.load %arg8[%c0_28, %c0_29] : memref<128x512xf32, #tpu.memory_space<vmem>>, vector<128x512xf32>
    %cst_30 = arith.constant dense<0.000000e+00> : vector<128x512xf32>
    %99 = tpu.matmul %97, %98, %cst_30 {dimension_numbers = #tpu.dot_dimension_numbers<[1], [0], [0], [1], [0, 0, 1, 1], [], []>} : vector<128x128xf32>, vector<128x512xf32>, vector<128x512xf32> -> vector<128x512xf32>
    %c0_31 = arith.constant 0 : index
    %c0_32 = arith.constant 0 : index
    %100 = vector.load %arg9[%c0_31, %c0_32] : memref<1x512xf32, #tpu.memory_space<vmem>>, vector<1x512xf32>
    %101 = vector.shape_cast %100 : vector<1x512xf32> to vector<512xf32>
    %102 = vector.shape_cast %101 : vector<512xf32> to vector<1x512xf32>
    %103 = vector.broadcast %102 : vector<1x512xf32> to vector<128x512xf32>
    %104 = arith.addf %99, %103 : vector<128x512xf32>
    %cst_33 = arith.constant 5.000000e-01 : f32
    %105 = vector.broadcast %cst_33 : f32 to vector<128x512xf32>
    %106 = arith.mulf %105, %104 : vector<128x512xf32>
    %cst_34 = arith.constant 0.707106769 : f32
    %107 = vector.broadcast %cst_34 : f32 to vector<128x512xf32>
    %108 = arith.mulf %104, %107 : vector<128x512xf32>
    %109 = math.erf %108 : vector<128x512xf32>
    %cst_35 = arith.constant 1.000000e+00 : f32
    %110 = vector.broadcast %cst_35 : f32 to vector<128x512xf32>
    %111 = arith.addf %110, %109 : vector<128x512xf32>
    %112 = arith.mulf %106, %111 : vector<128x512xf32>
    %c0_36 = arith.constant 0 : index
    %c0_37 = arith.constant 0 : index
    %113 = vector.load %arg10[%c0_36, %c0_37] : memref<512x128xf32, #tpu.memory_space<vmem>>, vector<512x128xf32>
    %cst_38 = arith.constant dense<0.000000e+00> : vector<128x128xf32>
    %114 = tpu.matmul %112, %113, %cst_38 {dimension_numbers = #tpu.dot_dimension_numbers<[1], [0], [0], [1], [0, 0, 1, 1], [], []>} : vector<128x512xf32>, vector<512x128xf32>, vector<128x128xf32> -> vector<128x128xf32>
    %c0_39 = arith.constant 0 : index
    %c0_40 = arith.constant 0 : index
    %115 = vector.load %arg11[%c0_39, %c0_40] : memref<1x128xf32, #tpu.memory_space<vmem>>, vector<1x128xf32>
    %116 = vector.shape_cast %115 : vector<1x128xf32> to vector<128xf32>
    %117 = vector.shape_cast %116 : vector<128xf32> to vector<1x128xf32>
    %118 = vector.broadcast %117 : vector<1x128xf32> to vector<128x128xf32>
    %119 = arith.addf %114, %118 : vector<128x128xf32>
    %120 = arith.addf %119, %69 : vector<128x128xf32>
    %121 = vector.shape_cast %120 : vector<128x128xf32> to vector<8x16x128xf32>
    %c0_41 = arith.constant 0 : index
    %c0_42 = arith.constant 0 : index
    %c0_43 = arith.constant 0 : index
    %122 = vector.load %arg12[%c0_41, %c0_42, %c0_43] : memref<8x16x128xf32, #tpu.memory_space<vmem>>, vector<8x16x128xf32>
    tpu.vector_store %arg12[%c0_41, %c0_42, %c0_43], %121 {strides = array<i32>} : memref<8x16x128xf32, #tpu.memory_space<vmem>>, vector<8x16x128xf32>,
    return
  }
  func.func @transform_0(%arg0: i32) -> (i32, i32, i32) {
    %c0_i32 = arith.constant 0 : i32
    %c0_i32_0 = arith.constant 0 : i32
    %c0_i32_1 = arith.constant 0 : i32
    return %arg0, %c0_i32, %c0_i32_0 : i32, i32, i32
  }
  func.func @transform_1(%arg0: i32) -> (i32, i32) {
    %c0_i32 = arith.constant 0 : i32
    %c0_i32_0 = arith.constant 0 : i32
    %c0_i32_1 = arith.constant 0 : i32
    return %c0_i32, %c0_i32_0 : i32, i32
  }
  func.func @transform_2(%arg0: i32) -> (i32, i32) {
    %c0_i32 = arith.constant 0 : i32
    %c0_i32_0 = arith.constant 0 : i32
    %c0_i32_1 = arith.constant 0 : i32
    return %c0_i32, %c0_i32_0 : i32, i32
  }
  func.func @transform_3(%arg0: i32) -> (i32, i32) {
    %c0_i32 = arith.constant 0 : i32
    %c0_i32_0 = arith.constant 0 : i32
    %c0_i32_1 = arith.constant 0 : i32
    return %c0_i32, %c0_i32_0 : i32, i32
  }
  func.func @transform_4(%arg0: i32) -> (i32, i32) {
    %c0_i32 = arith.constant 0 : i32
    %c0_i32_0 = arith.constant 0 : i32
    %c0_i32_1 = arith.constant 0 : i32
    return %c0_i32, %c0_i32_0 : i32, i32
  }
  func.func @transform_5(%arg0: i32) -> (i32, i32) {
    %c0_i32 = arith.constant 0 : i32
    %c0_i32_0 = arith.constant 0 : i32
    %c0_i32_1 = arith.constant 0 : i32
    return %c0_i32, %c0_i32_0 : i32, i32
  }
  func.func @transform_6(%arg0: i32) -> (i32, i32) {
    %c0_i32 = arith.constant 0 : i32
    %c0_i32_0 = arith.constant 0 : i32
    %c0_i32_1 = arith.constant 0 : i32
    return %c0_i32, %c0_i32_0 : i32, i32
  }
  func.func @transform_7(%arg0: i32) -> (i32, i32) {
    %c0_i32 = arith.constant 0 : i32
    %c0_i32_0 = arith.constant 0 : i32
    %c0_i32_1 = arith.constant 0 : i32
    return %c0_i32, %c0_i32_0 : i32, i32
  }
  func.func @transform_8(%arg0: i32) -> (i32, i32) {
    %c0_i32 = arith.constant 0 : i32
    %c0_i32_0 = arith.constant 0 : i32
    %c0_i32_1 = arith.constant 0 : i32
    return %c0_i32, %c0_i32_0 : i32, i32
  }
  func.func @transform_9(%arg0: i32) -> (i32, i32) {
    %c0_i32 = arith.constant 0 : i32
    %c0_i32_0 = arith.constant 0 : i32
    %c0_i32_1 = arith.constant 0 : i32
    return %c0_i32, %c0_i32_0 : i32, i32
  }
  func.func @transform_10(%arg0: i32) -> (i32, i32) {
    %c0_i32 = arith.constant 0 : i32
    %c0_i32_0 = arith.constant 0 : i32
    %c0_i32_1 = arith.constant 0 : i32
    return %c0_i32, %c0_i32_0 : i32, i32
  }
  func.func @transform_11(%arg0: i32) -> (i32, i32, i32) {
    %c0_i32 = arith.constant 0 : i32
    %c0_i32_0 = arith.constant 0 : i32
    %c0_i32_1 = arith.constant 0 : i32
    return %arg0, %c0_i32, %c0_i32_0 : i32, i32, i32
  }
}

</mosaic_0001>

<llo_original>
// kernel: tpu_custom_call.1
$region0: #{tpu_custom_call.1}
  #allocation0 [shape = 'u32[]', space=smem, size = 0x4, offset = 0x4, fixed_abs, tag = 'smem constant byte address 0x4 - core index']
  #allocation1 [shape = 'u32[144,128]{1,0:T(1,128)}', space=vmem, size = 0x12000, scoped, tag = 'internal scratch']
  %s0 = inlined_call_operand.hbm [shape: f32[8,16,128], index: 0, kind: input, shape index: {}]
  %s1 = inlined_call_operand.vmem [shape: f32[1,128], index: 1, kind: input, shape index: {}]
  %s2 = inlined_call_operand.vmem [shape: f32[1,128], index: 2, kind: input, shape index: {}]
  %s3 = inlined_call_operand.hbm [shape: f32[16,16], index: 3, kind: input, shape index: {}]
  %s4 = inlined_call_operand.hbm [shape: f32[16,16], index: 4, kind: input, shape index: {}]
  %s5 = inlined_call_operand.vmem [shape: f32[1,128], index: 5, kind: input, shape index: {}]
  %s6 = inlined_call_operand.vmem [shape: f32[1,128], index: 6, kind: input, shape index: {}]
  %s7 = inlined_call_operand.hbm [shape: f32[128,512], index: 7, kind: input, shape index: {}]
  %s8 = inlined_call_operand.vmem [shape: f32[1,512], index: 8, kind: input, shape index: {}]
  %s9 = inlined_call_operand.hbm [shape: f32[512,128], index: 9, kind: input, shape index: {}]
  %s10 = inlined_call_operand.vmem [shape: f32[1,128], index: 10, kind: input, shape index: {}]
  %s11 = inlined_call_operand.hbm [shape: f32[8,16,128], index: 11, kind: output, shape index: {}]
  %s12 = sld [smem:[#allocation0]]
  $region74: #{tpu_custom_call.1} parent=0
    _
  %s14 = ssub.s32 1, %s12
  %s15 = scalar_select 0, %s14, %s12
  $region1: #{tpu_custom_call.1} parent=0
    #allocation2 [shape = 'u8[65536]{0}', space=vmem, size = 0x10000, scoped, tag = 'input window, operand 0, single buffered']
    #allocation3 [shape = 's32[1]{0}', space=sflag, size = 0x4, scoped, tag = 'scoped memory for tpu_custom_call.1']
    #allocation4 [shape = 's32[1]{0}', space=sflag, size = 0x4, scoped, tag = 'scoped memory for tpu_custom_call.1']
    #allocation5 [shape = 'u8[8192]{0}', space=vmem, size = 0x2000, scoped, tag = 'input window, operand 3, single buffered']
    #allocation6 [shape = 's32[1]{0}', space=sflag, size = 0x4, scoped, tag = 'scoped memory for tpu_custom_call.1']
    #allocation7 [shape = 'u8[8192]{0}', space=vmem, size = 0x2000, scoped, tag = 'input window, operand 4, single buffered']
    #allocation8 [shape = 'u8[262144]{0}', space=vmem, size = 0x40000, scoped, tag = 'input window, operand 7, single buffered']
    #allocation9 [shape = 's32[1]{0}', space=sflag, size = 0x4, scoped, tag = 'scoped memory for tpu_custom_call.1']
    #allocation10 [shape = 'u8[262144]{0}', space=vmem, size = 0x40000, scoped, tag = 'input window, operand 9, single buffered']
    #allocation11 [shape = 'u8[65536]{0}', space=vmem, size = 0x10000, scoped, tag = 'output window, operand 0, single buffered']
    %16 = vsyncpa [#allocation3], 0
    %17 = vsyncpa [#allocation6], 0
    %18 = vsyncpa [#allocation9], 0
    %19 = vsyncpa [#allocation4], 0
    // Predicated region
    $region2: #{tpu_custom_call.1} parent=1 // pred_check
      _
    $region3: #{tpu_custom_call.1} parent=1 // pred_check_branch
      %21 = sbr.rel (0) target = $region5
    $region4: #{tpu_custom_call.1} parent=1 // pred_region
      %s23 = ssub.s32 2048, 2048
      %24 = vsyncadd [#allocation3], %s23
      %s25 = sshll.u32 [#allocation2], 4
      %s26 = int_to_ptr.vmem [resolvable:$true] %s25
      %31 = dma.hbm_to_vmem [thread:$0]  %s0, 2048, %s26, [#allocation3], 128, 128, 8
    $region5: #{tpu_custom_call.1} parent=1 // pred_fallthru
      _
    // Predicated region
    $region6: #{tpu_custom_call.1} parent=1 // pred_check
      _
    $region7: #{tpu_custom_call.1} parent=1 // pred_check_branch
      %33 = sbr.rel (0) target = $region9
    $region8: #{tpu_custom_call.1} parent=1 // pred_region
      _
    $region9: #{tpu_custom_call.1} parent=1 // pred_fallthru
      _
    // Predicated region
    $region10: #{tpu_custom_call.1} parent=1 // pred_check
      _
    $region11: #{tpu_custom_call.1} parent=1 // pred_check_branch
      %35 = sbr.rel (0) target = $region13
    $region12: #{tpu_custom_call.1} parent=1 // pred_region
      _
    $region13: #{tpu_custom_call.1} parent=1 // pred_fallthru
      _
    // Predicated region
    $region14: #{tpu_custom_call.1} parent=1 // pred_check
      _
    $region15: #{tpu_custom_call.1} parent=1 // pred_check_branch
      %37 = sbr.rel (0) target = $region17
    $region16: #{tpu_custom_call.1} parent=1 // pred_region
      %s39 = ssub.s32 256, 256
      %40 = vsyncadd [#allocation6], %s39
      %s41 = sshll.u32 [#allocation5], 4
      %s42 = int_to_ptr.vmem [resolvable:$true] %s41
      %47 = dma.hbm_to_vmem [thread:$0]  %s3, 256, %s42, [#allocation6], 128, 128, 8
    $region17: #{tpu_custom_call.1} parent=1 // pred_fallthru
      _
    // Predicated region
    $region18: #{tpu_custom_call.1} parent=1 // pred_check
      _
    $region19: #{tpu_custom_call.1} parent=1 // pred_check_branch
      %49 = sbr.rel (0) target = $region21
    $region20: #{tpu_custom_call.1} parent=1 // pred_region
      %s51 = ssub.s32 256, 256
      %52 = vsyncadd [#allocation6], %s51
      %s53 = sshll.u32 [#allocation7], 4
      %s54 = int_to_ptr.vmem [resolvable:$true] %s53
      %59 = dma.hbm_to_vmem [thread:$0]  %s4, 256, %s54, [#allocation6], 128, 128, 8
    $region21: #{tpu_custom_call.1} parent=1 // pred_fallthru
      _
    // Predicated region
    $region22: #{tpu_custom_call.1} parent=1 // pred_check
      _
    $region23: #{tpu_custom_call.1} parent=1 // pred_check_branch
      %61 = sbr.rel (0) target = $region25
    $region24: #{tpu_custom_call.1} parent=1 // pred_region
      _
    $region25: #{tpu_custom_call.1} parent=1 // pred_fallthru
      _
    // Predicated region
    $region26: #{tpu_custom_call.1} parent=1 // pred_check
      _
    $region27: #{tpu_custom_call.1} parent=1 // pred_check_branch
      %63 = sbr.rel (0) target = $region29
    $region28: #{tpu_custom_call.1} parent=1 // pred_region
      _
    $region29: #{tpu_custom_call.1} parent=1 // pred_fallthru
      _
    // Predicated region
    $region30: #{tpu_custom_call.1} parent=1 // pred_check
      _
    $region31: #{tpu_custom_call.1} parent=1 // pred_check_branch
      %65 = sbr.rel (0) target = $region33
    $region32: #{tpu_custom_call.1} parent=1 // pred_region
      %s67 = ssub.s32 8192, 8192
      %68 = vsyncadd [#allocation9], %s67
      %s69 = sshll.u32 [#allocation8], 4
      %s70 = int_to_ptr.vmem [resolvable:$true] %s69
      %75 = dma.hbm_to_vmem [thread:$0]  %s7, 8192, %s70, [#allocation9], 512, 512, 32
    $region33: #{tpu_custom_call.1} parent=1 // pred_fallthru
      _
    // Predicated region
    $region34: #{tpu_custom_call.1} parent=1 // pred_check
      _
    $region35: #{tpu_custom_call.1} parent=1 // pred_check_branch
      %77 = sbr.rel (0) target = $region37
    $region36: #{tpu_custom_call.1} parent=1 // pred_region
      _
    $region37: #{tpu_custom_call.1} parent=1 // pred_fallthru
      _
    // Predicated region
    $region38: #{tpu_custom_call.1} parent=1 // pred_check
      _
    $region39: #{tpu_custom_call.1} parent=1 // pred_check_branch
      %79 = sbr.rel (0) target = $region41
    $region40: #{tpu_custom_call.1} parent=1 // pred_region
      %s81 = ssub.s32 8192, 8192
      %82 = vsyncadd [#allocation9], %s81
      %s83 = sshll.u32 [#allocation10], 4
      %s84 = int_to_ptr.vmem [resolvable:$true] %s83
      %89 = dma.hbm_to_vmem [thread:$0]  %s9, 8192, %s84, [#allocation9], 128, 128, 8
    $region41: #{tpu_custom_call.1} parent=1 // pred_fallthru
      _
    // Predicated region
    $region42: #{tpu_custom_call.1} parent=1 // pred_check
      _
    $region43: #{tpu_custom_call.1} parent=1 // pred_check_branch
      %91 = sbr.rel (0) target = $region45
    $region44: #{tpu_custom_call.1} parent=1 // pred_region
      _
    $region45: #{tpu_custom_call.1} parent=1 // pred_fallthru
      _
    // Predicated region
    $region46: #{tpu_custom_call.1} parent=1 // pred_check
      _
    $region47: #{tpu_custom_call.1} parent=1 // pred_check_branch
      %93 = sbr.rel (0) target = $region49
    $region48: #{tpu_custom_call.1} parent=1 // pred_region
      %94 = dma.done [#allocation3], 2048
    $region49: #{tpu_custom_call.1} parent=1 // pred_fallthru
      _
    // Predicated region
    $region50: #{tpu_custom_call.1} parent=1 // pred_check
      _
    $region51: #{tpu_custom_call.1} parent=1 // pred_check_branch
      %96 = sbr.rel (0) target = $region53
    $region52: #{tpu_custom_call.1} parent=1 // pred_region
      %97 = dma.done [#allocation6], 256
    $region53: #{tpu_custom_call.1} parent=1 // pred_fallthru
      _
    // Predicated region
    $region54: #{tpu_custom_call.1} parent=1 // pred_check
      _
    $region55: #{tpu_custom_call.1} parent=1 // pred_check_branch
      %99 = sbr.rel (0) target = $region57
    $region56: #{tpu_custom_call.1} parent=1 // pred_region
      %100 = dma.done [#allocation6], 256
    $region57: #{tpu_custom_call.1} parent=1 // pred_fallthru
      _
    // Predicated region
    $region58: #{tpu_custom_call.1} parent=1 // pred_check
      _
    $region59: #{tpu_custom_call.1} parent=1 // pred_check_branch
      %102 = sbr.rel (0) target = $region61
    $region60: #{tpu_custom_call.1} parent=1 // pred_region
      %103 = dma.done [#allocation9], 8192
    $region61: #{tpu_custom_call.1} parent=1 // pred_fallthru
      _
    // Predicated region
    $region62: #{tpu_custom_call.1} parent=1 // pred_check
      _
    $region63: #{tpu_custom_call.1} parent=1 // pred_check_branch
      %105 = sbr.rel (0) target = $region65
    $region64: #{tpu_custom_call.1} parent=1 // pred_region
      %106 = dma.done [#allocation9], 8192
    $region65: #{tpu_custom_call.1} parent=1 // pred_fallthru
      _
    %v107 = vld [vmem:[#allocation2] sm:$0xff]
    %v108 = vld [vmem:[#allocation2 + $0x8] sm:$0xff]
    %v109 = vld [vmem:[#allocation2 + $0x10] sm:$0xff]
    %v110 = vld [vmem:[#allocation2 + $0x18] sm:$0xff]
    %v111 = vld [vmem:[#allocation2 + $0x20] sm:$0xff]
    %v112 = vld [vmem:[#allocation2 + $0x28] sm:$0xff]
    %v113 = vld [vmem:[#allocation2 + $0x30] sm:$0xff]
    %v114 = vld [vmem:[#allocation2 + $0x38] sm:$0xff]
    %v115 = vld [vmem:[#allocation2 + $0x40] sm:$0xff]
    %v116 = vld [vmem:[#allocation2 + $0x48] sm:$0xff]
    %v117 = vld [vmem:[#allocation2 + $0x50] sm:$0xff]
    %v118 = vld [vmem:[#allocation2 + $0x58] sm:$0xff]
    %v119 = vld [vmem:[#allocation2 + $0x60] sm:$0xff]
    %v120 = vld [vmem:[#allocation2 + $0x68] sm:$0xff]
    %v121 = vld [vmem:[#allocation2 + $0x70] sm:$0xff]
    %v122 = vld [vmem:[#allocation2 + $0x78] sm:$0xff]
    %v123 = vld [vmem:[%s1] sm:$0x1]
    %v124 = vld [vmem:[%s2] sm:$0x1]
    %125 = vadd.xlane.f32.xlu0 %v107
    %v126 = vpop.xlane.xlu0 %125
    %127 = vadd.xlane.f32.xlu0 %v108
    %v128 = vpop.xlane.xlu0 %127
    %129 = vadd.xlane.f32.xlu0 %v109
    %v130 = vpop.xlane.xlu0 %129
    %131 = vadd.xlane.f32.xlu0 %v110
    %v132 = vpop.xlane.xlu0 %131
    %133 = vadd.xlane.f32.xlu0 %v111
    %v134 = vpop.xlane.xlu0 %133
    %135 = vadd.xlane.f32.xlu0 %v112
    %v136 = vpop.xlane.xlu0 %135
    %137 = vadd.xlane.f32.xlu0 %v113
    %v138 = vpop.xlane.xlu0 %137
    %139 = vadd.xlane.f32.xlu0 %v114
    %v140 = vpop.xlane.xlu0 %139
    %141 = vadd.xlane.f32.xlu0 %v115
    %v142 = vpop.xlane.xlu0 %141
    %143 = vadd.xlane.f32.xlu0 %v116
    %v144 = vpop.xlane.xlu0 %143
    %145 = vadd.xlane.f32.xlu0 %v117
    %v146 = vpop.xlane.xlu0 %145
    %147 = vadd.xlane.f32.xlu0 %v118
    %v148 = vpop.xlane.xlu0 %147
    %149 = vadd.xlane.f32.xlu0 %v119
    %v150 = vpop.xlane.xlu0 %149
    %151 = vadd.xlane.f32.xlu0 %v120
    %v152 = vpop.xlane.xlu0 %151
    %153 = vadd.xlane.f32.xlu0 %v121
    %v154 = vpop.xlane.xlu0 %153
    %155 = vadd.xlane.f32.xlu0 %v122
    %v156 = vpop.xlane.xlu0 %155
    %v157 = vrcp.pop 128.0
    %v158 = vmul.f32 %v126, %v157
    %v159 = vmul.f32 %v128, %v157
    %v160 = vmul.f32 %v130, %v157
    %v161 = vmul.f32 %v132, %v157
    %v162 = vmul.f32 %v134, %v157
    %v163 = vmul.f32 %v136, %v157
    %v164 = vmul.f32 %v138, %v157
    %v165 = vmul.f32 %v140, %v157
    %v166 = vmul.f32 %v142, %v157
    %v167 = vmul.f32 %v144, %v157
    %v168 = vmul.f32 %v146, %v157
    %v169 = vmul.f32 %v148, %v157
    %v170 = vmul.f32 %v150, %v157
    %v171 = vmul.f32 %v152, %v157
    %v172 = vmul.f32 %v154, %v157
    %v173 = vmul.f32 %v156, %v157
    %v174 = vsub.f32 %v107, %v158
    %v175 = vsub.f32 %v108, %v159
    %v176 = vsub.f32 %v109, %v160
    %v177 = vsub.f32 %v110, %v161
    %v178 = vsub.f32 %v111, %v162
    %v179 = vsub.f32 %v112, %v163
    %v180 = vsub.f32 %v113, %v164
    %v181 = vsub.f32 %v114, %v165
    %v182 = vsub.f32 %v115, %v166
    %v183 = vsub.f32 %v116, %v167
    %v184 = vsub.f32 %v117, %v168
    %v185 = vsub.f32 %v118, %v169
    %v186 = vsub.f32 %v119, %v170
    %v187 = vsub.f32 %v120, %v171
    %v188 = vsub.f32 %v121, %v172
    %v189 = vsub.f32 %v122, %v173
    %v190 = vmul.f32 %v174, %v174
    %v191 = vmul.f32 %v175, %v175
    %v192 = vmul.f32 %v176, %v176
    %v193 = vmul.f32 %v177, %v177
    %v194 = vmul.f32 %v178, %v178
    %v195 = vmul.f32 %v179, %v179
    %v196 = vmul.f32 %v180, %v180
    %v197 = vmul.f32 %v181, %v181
    %v198 = vmul.f32 %v182, %v182
    %v199 = vmul.f32 %v183, %v183
    %v200 = vmul.f32 %v184, %v184
    %v201 = vmul.f32 %v185, %v185
    %v202 = vmul.f32 %v186, %v186
    %v203 = vmul.f32 %v187, %v187
    %v204 = vmul.f32 %v188, %v188
    %v205 = vmul.f32 %v189, %v189
    %206 = vadd.xlane.f32.xlu0 %v190
    %v207 = vpop.xlane.xlu0 %206
    %208 = vadd.xlane.f32.xlu0 %v191
    %v209 = vpop.xlane.xlu0 %208
    %210 = vadd.xlane.f32.xlu0 %v192
    %v211 = vpop.xlane.xlu0 %210
    %212 = vadd.xlane.f32.xlu0 %v193
    %v213 = vpop.xlane.xlu0 %212
    %214 = vadd.xlane.f32.xlu0 %v194
    %v215 = vpop.xlane.xlu0 %214
    %216 = vadd.xlane.f32.xlu0 %v195
    %v217 = vpop.xlane.xlu0 %216
    %218 = vadd.xlane.f32.xlu0 %v196
    %v219 = vpop.xlane.xlu0 %218
    %220 = vadd.xlane.f32.xlu0 %v197
    %v221 = vpop.xlane.xlu0 %220
    %222 = vadd.xlane.f32.xlu0 %v198
    %v223 = vpop.xlane.xlu0 %222
    %224 = vadd.xlane.f32.xlu0 %v199
    %v225 = vpop.xlane.xlu0 %224
    %226 = vadd.xlane.f32.xlu0 %v200
    %v227 = vpop.xlane.xlu0 %226
    %228 = vadd.xlane.f32.xlu0 %v201
    %v229 = vpop.xlane.xlu0 %228
    %230 = vadd.xlane.f32.xlu0 %v202
    %v231 = vpop.xlane.xlu0 %230
    %232 = vadd.xlane.f32.xlu0 %v203
    %v233 = vpop.xlane.xlu0 %232
    %234 = vadd.xlane.f32.xlu0 %v204
    %v235 = vpop.xlane.xlu0 %234
    %236 = vadd.xlane.f32.xlu0 %v205
    %v237 = vpop.xlane.xlu0 %236
    %v238 = vmul.f32 %v207, %v157
    %v239 = vmul.f32 %v209, %v157
    %v240 = vmul.f32 %v211, %v157
    %v241 = vmul.f32 %v213, %v157
    %v242 = vmul.f32 %v215, %v157
    %v243 = vmul.f32 %v217, %v157
    %v244 = vmul.f32 %v219, %v157
    %v245 = vmul.f32 %v221, %v157
    %v246 = vmul.f32 %v223, %v157
    %v247 = vmul.f32 %v225, %v157
    %v248 = vmul.f32 %v227, %v157
    %v249 = vmul.f32 %v229, %v157
    %v250 = vmul.f32 %v231, %v157
    %v251 = vmul.f32 %v233, %v157
    %v252 = vmul.f32 %v235, %v157
    %v253 = vmul.f32 %v237, %v157
    %v254 = vadd.f32 %v238, 1e-05
    %v255 = vadd.f32 %v239, 1e-05
    %v256 = vadd.f32 %v240, 1e-05
    %v257 = vadd.f32 %v241, 1e-05
    %v258 = vadd.f32 %v242, 1e-05
    %v259 = vadd.f32 %v243, 1e-05
    %v260 = vadd.f32 %v244, 1e-05
    %v261 = vadd.f32 %v245, 1e-05
    %v262 = vadd.f32 %v246, 1e-05
    %v263 = vadd.f32 %v247, 1e-05
    %v264 = vadd.f32 %v248, 1e-05
    %v265 = vadd.f32 %v249, 1e-05
    %v266 = vadd.f32 %v250, 1e-05
    %v267 = vadd.f32 %v251, 1e-05
    %v268 = vadd.f32 %v252, 1e-05
    %v269 = vadd.f32 %v253, 1e-05
    %v270 = vrsqrt.pop %v254
    %v271 = vrsqrt.pop %v255
    %v272 = vrsqrt.pop %v256
    %v273 = vrsqrt.pop %v257
    %v274 = vrsqrt.pop %v258
    %v275 = vrsqrt.pop %v259
    %v276 = vrsqrt.pop %v260
    %v277 = vrsqrt.pop %v261
    %v278 = vrsqrt.pop %v262
    %v279 = vrsqrt.pop %v263
    %v280 = vrsqrt.pop %v264
    %v281 = vrsqrt.pop %v265
    %v282 = vrsqrt.pop %v266
    %v283 = vrsqrt.pop %v267
    %v284 = vrsqrt.pop %v268
    %v285 = vrsqrt.pop %v269
    %v286 = vmul.f32 %v174, %v270
    %v287 = vmul.f32 %v175, %v271
    %v288 = vmul.f32 %v176, %v272
    %v289 = vmul.f32 %v177, %v273
    %v290 = vmul.f32 %v178, %v274
    %v291 = vmul.f32 %v179, %v275
    %v292 = vmul.f32 %v180, %v276
    %v293 = vmul.f32 %v181, %v277
    %v294 = vmul.f32 %v182, %v278
    %v295 = vmul.f32 %v183, %v279
    %v296 = vmul.f32 %v184, %v280
    %v297 = vmul.f32 %v185, %v281
    %v298 = vmul.f32 %v186, %v282
    %v299 = vmul.f32 %v187, %v283
    %v300 = vmul.f32 %v188, %v284
    %v301 = vmul.f32 %v189, %v285
    %v303 = vlaneseq
    %v304 = vshrl.u32 %v303, 7
    %v305 = vsub.s32 0, %v304
    %v306 = vrot.slane %v123, %v305
    %v308 = vmul.f32 %v286, %v306
    %v309 = vmul.f32 %v287, %v306
    %v310 = vmul.f32 %v288, %v306
    %v311 = vmul.f32 %v289, %v306
    %v312 = vmul.f32 %v290, %v306
    %v313 = vmul.f32 %v291, %v306
    %v314 = vmul.f32 %v292, %v306
    %v315 = vmul.f32 %v293, %v306
    %v316 = vmul.f32 %v294, %v306
    %v317 = vmul.f32 %v295, %v306
    %v318 = vmul.f32 %v296, %v306
    %v319 = vmul.f32 %v297, %v306
    %v320 = vmul.f32 %v298, %v306
    %v321 = vmul.f32 %v299, %v306
    %v322 = vmul.f32 %v300, %v306
    %v323 = vmul.f32 %v301, %v306
    %v325 = vlaneseq
    %v326 = vshrl.u32 %v325, 7
    %v327 = vsub.s32 0, %v326
    %v328 = vrot.slane %v124, %v327
    %v330 = vadd.f32 %v308, %v328
    %v331 = vadd.f32 %v309, %v328
    %v332 = vadd.f32 %v310, %v328
    %v333 = vadd.f32 %v311, %v328
    %v334 = vadd.f32 %v312, %v328
    %v335 = vadd.f32 %v313, %v328
    %v336 = vadd.f32 %v314, %v328
    %v337 = vadd.f32 %v315, %v328
    %v338 = vadd.f32 %v316, %v328
    %v339 = vadd.f32 %v317, %v328
    %v340 = vadd.f32 %v318, %v328
    %v341 = vadd.f32 %v319, %v328
    %v342 = vadd.f32 %v320, %v328
    %v343 = vadd.f32 %v321, %v328
    %v344 = vadd.f32 %v322, %v328
    %v345 = vadd.f32 %v323, %v328
    %v346 = vld [vmem:[#allocation5] sm:$0xff]
    %v347 = vld [vmem:[#allocation5 + $0x8] sm:$0xff]
    %vm348 = vcmask 130048
    %v350 = vsel %vm348, %v346, 0
    %v353 = vsel %vm348, %v347, 0
    %355 = vmatprep.subr.mxu0 %v332
    %356 = vmatpush1.msra.mxu0 %v330
    %357 = vmatprep.subr.mxu0 %v333
    %358 = vmatpush1.msra.mxu0 %v331
    %359 = vmatprep.subr.mxu0 0.0
    %360 = vmatpush1.msra.mxu0 0.0
    %361 = vmatprep.subr.mxu0 0.0
    %362 = vmatpush1.msra.mxu0 0.0
    %363 = vmatprep.subr.mxu0 0.0
    %364 = vmatpush1.msra.mxu0 0.0
    %365 = vmatprep.subr.mxu0 0.0
    %366 = vmatpush1.msra.mxu0 0.0
    %367 = vmatprep.subr.mxu0 0.0
    %368 = vmatpush1.msra.mxu0 0.0
    %369 = vmatprep.subr.mxu0 0.0
    %370 = vmatpush1.msra.mxu0 0.0
    %371 = vmatprep.subr.mxu0 0.0
    %372 = vmatpush1.msra.mxu0 0.0
    %373 = vmatprep.subr.mxu0 0.0
    %374 = vmatpush1.msra.mxu0 0.0
    %375 = vmatprep.subr.mxu0 0.0
    %376 = vmatpush1.msra.mxu0 0.0
    %377 = vmatprep.subr.mxu0 0.0
    %378 = vmatpush1.msra.mxu0 0.0
    %379 = vmatprep.subr.mxu0 0.0
    %380 = vmatpush1.msra.mxu0 0.0
    %381 = vmatprep.subr.mxu0 0.0
    %382 = vmatpush1.msra.mxu0 0.0
    %383 = vmatprep.subr.mxu0 0.0
    %384 = vmatpush1.msra.mxu0 0.0
    %385 = vmatprep.subr.mxu0 0.0
    %386 = vmatpush1.msra.mxu0 0.0
    %387 = vmatprep.subr.mxu0 0.0
    %388 = vmatpush1.msra.mxu0 0.0
    %389 = vmatprep.subr.mxu0 0.0
    %390 = vmatpush1.msra.mxu0 0.0
    %391 = vmatprep.subr.mxu0 0.0
    %392 = vmatpush1.msra.mxu0 0.0
    %393 = vmatprep.subr.mxu0 0.0
    %394 = vmatpush1.msra.mxu0 0.0
    %395 = vmatprep.subr.mxu0 0.0
    %396 = vmatpush1.msra.mxu0 0.0
    %397 = vmatprep.subr.mxu0 0.0
    %398 = vmatpush1.msra.mxu0 0.0
    %399 = vmatprep.subr.mxu0 0.0
    %400 = vmatpush1.msra.mxu0 0.0
    %401 = vmatprep.subr.mxu0 0.0
    %402 = vmatpush1.msra.mxu0 0.0
    %403 = vmatprep.subr.mxu0 0.0
    %404 = vmatpush1.msra.mxu0 0.0
    %405 = vmatprep.subr.mxu0 0.0
    %406 = vmatpush1.msra.mxu0 0.0
    %407 = vmatprep.subr.mxu0 0.0
    %408 = vmatpush1.msra.mxu0 0.0
    %409 = vmatprep.subr.mxu0 0.0
    %410 = vmatpush1.msra.mxu0 0.0
    %411 = vmatprep.subr.mxu0 0.0
    %412 = vmatpush1.msra.mxu0 0.0
    %413 = vmatprep.subr.mxu0 0.0
    %414 = vmatpush1.msra.mxu0 0.0
    %415 = vmatprep.subr.mxu0 0.0
    %416 = vmatpush1.msra.mxu0 0.0
    %417 = vmatprep.subr.mxu0 0.0
    %418 = vmatpush1.msra.mxu0 0.0
    %419 = vmatprep.mubr.f32.mxu0 0.0
    %420 = vmatmul.mubr.f32.gmra.mrb[0].mxu0 %v350
    %v421 = vpop.f32.mrb[0].mxu0
    %v422 = vadd.f32 0.0, %v421
    %v423 = vpop.f32.mrb[0].mxu0
    %v424 = vadd.f32 0.0, %v423
    %425 = vmatprep.mubr.f32.mxu0 0.0
    %426 = vmatmul.mubr.f32.gmra.mrb[0].mxu0 %v353
    %v427 = vpop.f32.mrb[0].mxu0
    %v428 = vadd.f32 0.0, %v427
    %v429 = vpop.f32.mrb[0].mxu0
    %v430 = vadd.f32 0.0, %v429
    %431 = vdwg.mxu0
    %432 = vmatprep.subr.mxu0 %v336
    %433 = vmatpush1.msra.mxu0 %v334
    %434 = vmatprep.subr.mxu0 %v337
    %435 = vmatpush1.msra.mxu0 %v335
    %436 = vmatprep.subr.mxu0 0.0
    %437 = vmatpush1.msra.mxu0 0.0
    %438 = vmatprep.subr.mxu0 0.0
    %439 = vmatpush1.msra.mxu0 0.0
    %440 = vmatprep.subr.mxu0 0.0
    %441 = vmatpush1.msra.mxu0 0.0
    %442 = vmatprep.subr.mxu0 0.0
    %443 = vmatpush1.msra.mxu0 0.0
    %444 = vmatprep.subr.mxu0 0.0
    %445 = vmatpush1.msra.mxu0 0.0
    %446 = vmatprep.subr.mxu0 0.0
    %447 = vmatpush1.msra.mxu0 0.0
    %448 = vmatprep.subr.mxu0 0.0
    %449 = vmatpush1.msra.mxu0 0.0
    %450 = vmatprep.subr.mxu0 0.0
    %451 = vmatpush1.msra.mxu0 0.0
    %452 = vmatprep.subr.mxu0 0.0
    %453 = vmatpush1.msra.mxu0 0.0
    %454 = vmatprep.subr.mxu0 0.0
    %455 = vmatpush1.msra.mxu0 0.0
    %456 = vmatprep.subr.mxu0 0.0
    %457 = vmatpush1.msra.mxu0 0.0
    %458 = vmatprep.subr.mxu0 0.0
    %459 = vmatpush1.msra.mxu0 0.0
    %460 = vmatprep.subr.mxu0 0.0
    %461 = vmatpush1.msra.mxu0 0.0
    %462 = vmatprep.subr.mxu0 0.0
    %463 = vmatpush1.msra.mxu0 0.0
    %464 = vmatprep.subr.mxu0 0.0
    %465 = vmatpush1.msra.mxu0 0.0
    %466 = vmatprep.subr.mxu0 0.0
    %467 = vmatpush1.msra.mxu0 0.0
    %468 = vmatprep.subr.mxu0 0.0
    %469 = vmatpush1.msra.mxu0 0.0
    %470 = vmatprep.subr.mxu0 0.0
    %471 = vmatpush1.msra.mxu0 0.0
    %472 = vmatprep.subr.mxu0 0.0
    %473 = vmatpush1.msra.mxu0 0.0
    %474 = vmatprep.subr.mxu0 0.0
    %475 = vmatpush1.msra.mxu0 0.0
    %476 = vmatprep.subr.mxu0 0.0
    %477 = vmatpush1.msra.mxu0 0.0
    %478 = vmatprep.subr.mxu0 0.0
    %479 = vmatpush1.msra.mxu0 0.0
    %480 = vmatprep.subr.mxu0 0.0
    %481 = vmatpush1.msra.mxu0 0.0
    %482 = vmatprep.subr.mxu0 0.0
    %483 = vmatpush1.msra.mxu0 0.0
    %484 = vmatprep.subr.mxu0 0.0
    %485 = vmatpush1.msra.mxu0 0.0
    %486 = vmatprep.subr.mxu0 0.0
    %487 = vmatpush1.msra.mxu0 0.0
    %488 = vmatprep.subr.mxu0 0.0
    %489 = vmatpush1.msra.mxu0 0.0
    %490 = vmatprep.subr.mxu0 0.0
    %491 = vmatpush1.msra.mxu0 0.0
    %492 = vmatprep.subr.mxu0 0.0
    %493 = vmatpush1.msra.mxu0 0.0
    %494 = vmatprep.subr.mxu0 0.0
    %495 = vmatpush1.msra.mxu0 0.0
    %496 = vmatprep.mubr.f32.mxu0 0.0
    %497 = vmatmul.mubr.f32.gmra.mrb[0].mxu0 %v350
    %v498 = vpop.f32.mrb[0].mxu0
    %v499 = vadd.f32 0.0, %v498
    %v500 = vpop.f32.mrb[0].mxu0
    %v501 = vadd.f32 0.0, %v500
    %502 = vmatprep.mubr.f32.mxu0 0.0
    %503 = vmatmul.mubr.f32.gmra.mrb[0].mxu0 %v353
    %v504 = vpop.f32.mrb[0].mxu0
    %v505 = vadd.f32 0.0, %v504
    %v506 = vpop.f32.mrb[0].mxu0
    %v507 = vadd.f32 0.0, %v506
    %508 = vdwg.mxu0
    %509 = vmatprep.subr.mxu0 %v340
    %510 = vmatpush1.msra.mxu0 %v338
    %511 = vmatprep.subr.mxu0 %v341
    %512 = vmatpush1.msra.mxu0 %v339
    %513 = vmatprep.subr.mxu0 0.0
    %514 = vmatpush1.msra.mxu0 0.0
    %515 = vmatprep.subr.mxu0 0.0
    %516 = vmatpush1.msra.mxu0 0.0
    %517 = vmatprep.subr.mxu0 0.0
    %518 = vmatpush1.msra.mxu0 0.0
    %519 = vmatprep.subr.mxu0 0.0
    %520 = vmatpush1.msra.mxu0 0.0
    %521 = vmatprep.subr.mxu0 0.0
    %522 = vmatpush1.msra.mxu0 0.0
    %523 = vmatprep.subr.mxu0 0.0
    %524 = vmatpush1.msra.mxu0 0.0
    %525 = vmatprep.subr.mxu0 0.0
    %526 = vmatpush1.msra.mxu0 0.0
    %527 = vmatprep.subr.mxu0 0.0
    %528 = vmatpush1.msra.mxu0 0.0
    %529 = vmatprep.subr.mxu0 0.0
    %530 = vmatpush1.msra.mxu0 0.0
    %531 = vmatprep.subr.mxu0 0.0
    %532 = vmatpush1.msra.mxu0 0.0
    %533 = vmatprep.subr.mxu0 0.0
    %534 = vmatpush1.msra.mxu0 0.0
    %535 = vmatprep.subr.mxu0 0.0
    %536 = vmatpush1.msra.mxu0 0.0
    %537 = vmatprep.subr.mxu0 0.0
    %538 = vmatpush1.msra.mxu0 0.0
    %539 = vmatprep.subr.mxu0 0.0
    %540 = vmatpush1.msra.mxu0 0.0
    %541 = vmatprep.subr.mxu0 0.0
    %542 = vmatpush1.msra.mxu0 0.0
    %543 = vmatprep.subr.mxu0 0.0
    %544 = vmatpush1.msra.mxu0 0.0
    %545 = vmatprep.subr.mxu0 0.0
    %546 = vmatpush1.msra.mxu0 0.0
    %547 = vmatprep.subr.mxu0 0.0
    %548 = vmatpush1.msra.mxu0 0.0
    %549 = vmatprep.subr.mxu0 0.0
    %550 = vmatpush1.msra.mxu0 0.0
    %551 = vmatprep.subr.mxu0 0.0
    %552 = vmatpush1.msra.mxu0 0.0
    %553 = vmatprep.subr.mxu0 0.0
    %554 = vmatpush1.msra.mxu0 0.0
    %555 = vmatprep.subr.mxu0 0.0
    %556 = vmatpush1.msra.mxu0 0.0
    %557 = vmatprep.subr.mxu0 0.0
    %558 = vmatpush1.msra.mxu0 0.0
    %559 = vmatprep.subr.mxu0 0.0
    %560 = vmatpush1.msra.mxu0 0.0
    %561 = vmatprep.subr.mxu0 0.0
    %562 = vmatpush1.msra.mxu0 0.0
    %563 = vmatprep.subr.mxu0 0.0
    %564 = vmatpush1.msra.mxu0 0.0
    %565 = vmatprep.subr.mxu0 0.0
    %566 = vmatpush1.msra.mxu0 0.0
    %567 = vmatprep.subr.mxu0 0.0
    %568 = vmatpush1.msra.mxu0 0.0
    %569 = vmatprep.subr.mxu0 0.0
    %570 = vmatpush1.msra.mxu0 0.0
    %571 = vmatprep.subr.mxu0 0.0
    %572 = vmatpush1.msra.mxu0 0.0
    %573 = vmatprep.mubr.f32.mxu0 0.0
    %574 = vmatmul.mubr.f32.gmra.mrb[0].mxu0 %v350
    %v575 = vpop.f32.mrb[0].mxu0
    %v576 = vadd.f32 0.0, %v575
    %v577 = vpop.f32.mrb[0].mxu0
    %v578 = vadd.f32 0.0, %v577
    %579 = vmatprep.mubr.f32.mxu0 0.0
    %580 = vmatmul.mubr.f32.gmra.mrb[0].mxu0 %v353
    %v581 = vpop.f32.mrb[0].mxu0
    %v582 = vadd.f32 0.0, %v581
    %v583 = vpop.f32.mrb[0].mxu0
    %v584 = vadd.f32 0.0, %v583
    %585 = vdwg.mxu0
    %586 = vmatprep.subr.mxu0 %v344
    %587 = vmatpush1.msra.mxu0 %v342
    %588 = vmatprep.subr.mxu0 %v345
    %589 = vmatpush1.msra.mxu0 %v343
    %590 = vmatprep.subr.mxu0 0.0
    %591 = vmatpush1.msra.mxu0 0.0
    %592 = vmatprep.subr.mxu0 0.0
    %593 = vmatpush1.msra.mxu0 0.0
    %594 = vmatprep.subr.mxu0 0.0
    %595 = vmatpush1.msra.mxu0 0.0
    %596 = vmatprep.subr.mxu0 0.0
    %597 = vmatpush1.msra.mxu0 0.0
    %598 = vmatprep.subr.mxu0 0.0
    %599 = vmatpush1.msra.mxu0 0.0
    %600 = vmatprep.subr.mxu0 0.0
    %601 = vmatpush1.msra.mxu0 0.0
    %602 = vmatprep.subr.mxu0 0.0
    %603 = vmatpush1.msra.mxu0 0.0
    %604 = vmatprep.subr.mxu0 0.0
    %605 = vmatpush1.msra.mxu0 0.0
    %606 = vmatprep.subr.mxu0 0.0
    %607 = vmatpush1.msra.mxu0 0.0
    %608 = vmatprep.subr.mxu0 0.0
    %609 = vmatpush1.msra.mxu0 0.0
    %610 = vmatprep.subr.mxu0 0.0
    %611 = vmatpush1.msra.mxu0 0.0
    %612 = vmatprep.subr.mxu0 0.0
    %613 = vmatpush1.msra.mxu0 0.0
    %614 = vmatprep.subr.mxu0 0.0
    %615 = vmatpush1.msra.mxu0 0.0
    %616 = vmatprep.subr.mxu0 0.0
    %617 = vmatpush1.msra.mxu0 0.0
    %618 = vmatprep.subr.mxu0 0.0
    %619 = vmatpush1.msra.mxu0 0.0
    %620 = vmatprep.subr.mxu0 0.0
    %621 = vmatpush1.msra.mxu0 0.0
    %622 = vmatprep.subr.mxu0 0.0
    %623 = vmatpush1.msra.mxu0 0.0
    %624 = vmatprep.subr.mxu0 0.0
    %625 = vmatpush1.msra.mxu0 0.0
    %626 = vmatprep.subr.mxu0 0.0
    %627 = vmatpush1.msra.mxu0 0.0
    %628 = vmatprep.subr.mxu0 0.0
    %629 = vmatpush1.msra.mxu0 0.0
    %630 = vmatprep.subr.mxu0 0.0
    %631 = vmatpush1.msra.mxu0 0.0
    %632 = vmatprep.subr.mxu0 0.0
    %633 = vmatpush1.msra.mxu0 0.0
    %634 = vmatprep.subr.mxu0 0.0
    %635 = vmatpush1.msra.mxu0 0.0
    %636 = vmatprep.subr.mxu0 0.0
    %637 = vmatpush1.msra.mxu0 0.0
    %638 = vmatprep.subr.mxu0 0.0
    %639 = vmatpush1.msra.mxu0 0.0
    %640 = vmatprep.subr.mxu0 0.0
    %641 = vmatpush1.msra.mxu0 0.0
    %642 = vmatprep.subr.mxu0 0.0
    %643 = vmatpush1.msra.mxu0 0.0
    %644 = vmatprep.subr.mxu0 0.0
    %645 = vmatpush1.msra.mxu0 0.0
    %646 = vmatprep.subr.mxu0 0.0
    %647 = vmatpush1.msra.mxu0 0.0
    %648 = vmatprep.subr.mxu0 0.0
    %649 = vmatpush1.msra.mxu0 0.0
    %650 = vmatprep.mubr.f32.mxu0 0.0
    %651 = vmatmul.mubr.f32.gmra.mrb[0].mxu0 %v350
    %v652 = vpop.f32.mrb[0].mxu0
    %v653 = vadd.f32 0.0, %v652
    %v654 = vpop.f32.mrb[0].mxu0
    %v655 = vadd.f32 0.0, %v654
    %656 = vmatprep.mubr.f32.mxu0 0.0
    %657 = vmatmul.mubr.f32.gmra.mrb[0].mxu0 %v353
    %v658 = vpop.f32.mrb[0].mxu0
    %v659 = vadd.f32 0.0, %v658
    %v660 = vpop.f32.mrb[0].mxu0
    %v661 = vadd.f32 0.0, %v660
    %662 = vdwg.mxu0
    %v663 = vmul.f32 %v422, 0.5
    %v664 = vmul.f32 %v424, 0.5
    %v665 = vmul.f32 %v499, 0.5
    %v666 = vmul.f32 %v501, 0.5
    %v667 = vmul.f32 %v576, 0.5
    %v668 = vmul.f32 %v578, 0.5
    %v669 = vmul.f32 %v653, 0.5
    %v670 = vmul.f32 %v655, 0.5
    %v671 = vmul.f32 %v428, 0.5
    %v672 = vmul.f32 %v430, 0.5
    %v673 = vmul.f32 %v505, 0.5
    %v674 = vmul.f32 %v507, 0.5
    %v675 = vmul.f32 %v582, 0.5
    %v676 = vmul.f32 %v584, 0.5
    %v677 = vmul.f32 %v659, 0.5
    %v678 = vmul.f32 %v661, 0.5
    %v679 = vmul.f32 %v422, 0.70710677
    %v680 = vmul.f32 %v424, 0.70710677
    %v681 = vmul.f32 %v499, 0.70710677
    %v682 = vmul.f32 %v501, 0.70710677
    %v683 = vmul.f32 %v576, 0.70710677
    %v684 = vmul.f32 %v578, 0.70710677
    %v685 = vmul.f32 %v653, 0.70710677
    %v686 = vmul.f32 %v655, 0.70710677
    %v687 = vmul.f32 %v428, 0.70710677
    %v688 = vmul.f32 %v430, 0.70710677
    %v689 = vmul.f32 %v505, 0.70710677
    %v690 = vmul.f32 %v507, 0.70710677
    %v691 = vmul.f32 %v582, 0.70710677
    %v692 = vmul.f32 %v584, 0.70710677
    %v693 = vmul.f32 %v659, 0.70710677
    %v694 = vmul.f32 %v661, 0.70710677
    %v695 = verf.f32.pop %v679
    %v696 = verf.f32.pop %v680
    %v697 = verf.f32.pop %v681
    %v698 = verf.f32.pop %v682
    %v699 = verf.f32.pop %v683
    %v700 = verf.f32.pop %v684
    %v701 = verf.f32.pop %v685
    %v702 = verf.f32.pop %v686
    %v703 = verf.f32.pop %v687
    %v704 = verf.f32.pop %v688
    %v705 = verf.f32.pop %v689
    %v706 = verf.f32.pop %v690
    %v707 = verf.f32.pop %v691
    %v708 = verf.f32.pop %v692
    %v709 = verf.f32.pop %v693
    %v710 = verf.f32.pop %v694
    %v711 = vadd.f32 %v695, 1.0
    %v712 = vadd.f32 %v696, 1.0
    %v713 = vadd.f32 %v697, 1.0
    %v714 = vadd.f32 %v698, 1.0
    %v715 = vadd.f32 %v699, 1.0
    %v716 = vadd.f32 %v700, 1.0
    %v717 = vadd.f32 %v701, 1.0
    %v718 = vadd.f32 %v702, 1.0
    %v719 = vadd.f32 %v703, 1.0
    %v720 = vadd.f32 %v704, 1.0
    %v721 = vadd.f32 %v705, 1.0
    %v722 = vadd.f32 %v706, 1.0
    %v723 = vadd.f32 %v707, 1.0
    %v724 = vadd.f32 %v708, 1.0
    %v725 = vadd.f32 %v709, 1.0
    %v726 = vadd.f32 %v710, 1.0
    %v727 = vmul.f32 %v663, %v711
    %v728 = vmul.f32 %v664, %v712
    %v729 = vmul.f32 %v665, %v713
    %v730 = vmul.f32 %v666, %v714
    %v731 = vmul.f32 %v667, %v715
    %v732 = vmul.f32 %v668, %v716
    %v733 = vmul.f32 %v669, %v717
    %v734 = vmul.f32 %v670, %v718
    %v735 = vmul.f32 %v671, %v719
    %v736 = vmul.f32 %v672, %v720
    %v737 = vmul.f32 %v673, %v721
    %v738 = vmul.f32 %v674, %v722
    %v739 = vmul.f32 %v675, %v723
    %v740 = vmul.f32 %v676, %v724
    %v741 = vmul.f32 %v677, %v725
    %v742 = vmul.f32 %v678, %v726
    %v743 = vld [vmem:[#allocation7] sm:$0xff]
    %v744 = vld [vmem:[#allocation7 + $0x8] sm:$0xff]
    %v746 = vsel %vm348, %v743, 0
    %v749 = vsel %vm348, %v744, 0
    %751 = vmatprep.subr.mxu0 %v728
    %752 = vmatpush1.msra.mxu0 %v727
    %753 = vmatprep.subr.mxu0 %v736
    %754 = vmatpush1.msra.mxu0 %v735
    %755 = vmatprep.subr.mxu0 0.0
    %756 = vmatpush1.msra.mxu0 0.0
    %757 = vmatprep.subr.mxu0 0.0
    %758 = vmatpush1.msra.mxu0 0.0
    %759 = vmatprep.subr.mxu0 0.0
    %760 = vmatpush1.msra.mxu0 0.0
    %761 = vmatprep.subr.mxu0 0.0
    %762 = vmatpush1.msra.mxu0 0.0
    %763 = vmatprep.subr.mxu0 0.0
    %764 = vmatpush1.msra.mxu0 0.0
    %765 = vmatprep.subr.mxu0 0.0
    %766 = vmatpush1.msra.mxu0 0.0
    %767 = vmatprep.subr.mxu0 0.0
    %768 = vmatpush1.msra.mxu0 0.0
    %769 = vmatprep.subr.mxu0 0.0
    %770 = vmatpush1.msra.mxu0 0.0
    %771 = vmatprep.subr.mxu0 0.0
    %772 = vmatpush1.msra.mxu0 0.0
    %773 = vmatprep.subr.mxu0 0.0
    %774 = vmatpush1.msra.mxu0 0.0
    %775 = vmatprep.subr.mxu0 0.0
    %776 = vmatpush1.msra.mxu0 0.0
    %777 = vmatprep.subr.mxu0 0.0
    %778 = vmatpush1.msra.mxu0 0.0
    %779 = vmatprep.subr.mxu0 0.0
    %780 = vmatpush1.msra.mxu0 0.0
    %781 = vmatprep.subr.mxu0 0.0
    %782 = vmatpush1.msra.mxu0 0.0
    %783 = vmatprep.subr.mxu0 0.0
    %784 = vmatpush1.msra.mxu0 0.0
    %785 = vmatprep.subr.mxu0 0.0
    %786 = vmatpush1.msra.mxu0 0.0
    %787 = vmatprep.subr.mxu0 0.0
    %788 = vmatpush1.msra.mxu0 0.0
    %789 = vmatprep.subr.mxu0 0.0
    %790 = vmatpush1.msra.mxu0 0.0
    %791 = vmatprep.subr.mxu0 0.0
    %792 = vmatpush1.msra.mxu0 0.0
    %793 = vmatprep.subr.mxu0 0.0
    %794 = vmatpush1.msra.mxu0 0.0
    %795 = vmatprep.subr.mxu0 0.0
    %796 = vmatpush1.msra.mxu0 0.0
    %797 = vmatprep.subr.mxu0 0.0
    %798 = vmatpush1.msra.mxu0 0.0
    %799 = vmatprep.subr.mxu0 0.0
    %800 = vmatpush1.msra.mxu0 0.0
    %801 = vmatprep.subr.mxu0 0.0
    %802 = vmatpush1.msra.mxu0 0.0
    %803 = vmatprep.subr.mxu0 0.0
    %804 = vmatpush1.msra.mxu0 0.0
    %805 = vmatprep.subr.mxu0 0.0
    %806 = vmatpush1.msra.mxu0 0.0
    %807 = vmatprep.subr.mxu0 0.0
    %808 = vmatpush1.msra.mxu0 0.0
    %809 = vmatprep.subr.mxu0 0.0
    %810 = vmatpush1.msra.mxu0 0.0
    %811 = vmatprep.subr.mxu0 0.0
    %812 = vmatpush1.msra.mxu0 0.0
    %813 = vmatprep.subr.mxu0 0.0
    %814 = vmatpush1.msra.mxu0 0.0
    %815 = vmatprep.mubr.f32.mxu0 0.0
    %816 = vmatmul.mubr.f32.gmra.mrb[0].mxu0 %v746
    %v817 = vpop.f32.mrb[0].mxu0
    %v818 = vadd.f32 0.0, %v817
    %v819 = vpop.f32.mrb[0].mxu0
    %v820 = vadd.f32 0.0, %v819
    %821 = vmatprep.mubr.f32.mxu0 0.0
    %822 = vmatmul.mubr.f32.gmra.mrb[0].mxu0 %v749
    %v823 = vpop.f32.mrb[0].mxu0
    %v824 = vadd.f32 0.0, %v823
    %v825 = vpop.f32.mrb[0].mxu0
    %v826 = vadd.f32 0.0, %v825
    %827 = vdwg.mxu0
    %828 = vmatprep.subr.mxu0 %v730
    %829 = vmatpush1.msra.mxu0 %v729
    %830 = vmatprep.subr.mxu0 %v738
    %831 = vmatpush1.msra.mxu0 %v737
    %832 = vmatprep.subr.mxu0 0.0
    %833 = vmatpush1.msra.mxu0 0.0
    %834 = vmatprep.subr.mxu0 0.0
    %835 = vmatpush1.msra.mxu0 0.0
    %836 = vmatprep.subr.mxu0 0.0
    %837 = vmatpush1.msra.mxu0 0.0
    %838 = vmatprep.subr.mxu0 0.0
    %839 = vmatpush1.msra.mxu0 0.0
    %840 = vmatprep.subr.mxu0 0.0
    %841 = vmatpush1.msra.mxu0 0.0
    %842 = vmatprep.subr.mxu0 0.0
    %843 = vmatpush1.msra.mxu0 0.0
    %844 = vmatprep.subr.mxu0 0.0
    %845 = vmatpush1.msra.mxu0 0.0
    %846 = vmatprep.subr.mxu0 0.0
    %847 = vmatpush1.msra.mxu0 0.0
    %848 = vmatprep.subr.mxu0 0.0
    %849 = vmatpush1.msra.mxu0 0.0
    %850 = vmatprep.subr.mxu0 0.0
    %851 = vmatpush1.msra.mxu0 0.0
    %852 = vmatprep.subr.mxu0 0.0
    %853 = vmatpush1.msra.mxu0 0.0
    %854 = vmatprep.subr.mxu0 0.0
    %855 = vmatpush1.msra.mxu0 0.0
    %856 = vmatprep.subr.mxu0 0.0
    %857 = vmatpush1.msra.mxu0 0.0
    %858 = vmatprep.subr.mxu0 0.0
    %859 = vmatpush1.msra.mxu0 0.0
    %860 = vmatprep.subr.mxu0 0.0
    %861 = vmatpush1.msra.mxu0 0.0
    %862 = vmatprep.subr.mxu0 0.0
    %863 = vmatpush1.msra.mxu0 0.0
    %864 = vmatprep.subr.mxu0 0.0
    %865 = vmatpush1.msra.mxu0 0.0
    %866 = vmatprep.subr.mxu0 0.0
    %867 = vmatpush1.msra.mxu0 0.0
    %868 = vmatprep.subr.mxu0 0.0
    %869 = vmatpush1.msra.mxu0 0.0
    %870 = vmatprep.subr.mxu0 0.0
    %871 = vmatpush1.msra.mxu0 0.0
    %872 = vmatprep.subr.mxu0 0.0
    %873 = vmatpush1.msra.mxu0 0.0
    %874 = vmatprep.subr.mxu0 0.0
    %875 = vmatpush1.msra.mxu0 0.0
    %876 = vmatprep.subr.mxu0 0.0
    %877 = vmatpush1.msra.mxu0 0.0
    %878 = vmatprep.subr.mxu0 0.0
    %879 = vmatpush1.msra.mxu0 0.0
    %880 = vmatprep.subr.mxu0 0.0
    %881 = vmatpush1.msra.mxu0 0.0
    %882 = vmatprep.subr.mxu0 0.0
    %883 = vmatpush1.msra.mxu0 0.0
    %884 = vmatprep.subr.mxu0 0.0
    %885 = vmatpush1.msra.mxu0 0.0
    %886 = vmatprep.subr.mxu0 0.0
    %887 = vmatpush1.msra.mxu0 0.0
    %888 = vmatprep.subr.mxu0 0.0
    %889 = vmatpush1.msra.mxu0 0.0
    %890 = vmatprep.subr.mxu0 0.0
    %891 = vmatpush1.msra.mxu0 0.0
    %892 = vmatprep.mubr.f32.mxu0 0.0
    %893 = vmatmul.mubr.f32.gmra.mrb[0].mxu0 %v746
    %v894 = vpop.f32.mrb[0].mxu0
    %v895 = vadd.f32 0.0, %v894
    %v896 = vpop.f32.mrb[0].mxu0
    %v897 = vadd.f32 0.0, %v896
    %898 = vmatprep.mubr.f32.mxu0 0.0
    %899 = vmatmul.mubr.f32.gmra.mrb[0].mxu0 %v749
    %v900 = vpop.f32.mrb[0].mxu0
    %v901 = vadd.f32 0.0, %v900
    %v902 = vpop.f32.mrb[0].mxu0
    %v903 = vadd.f32 0.0, %v902
    %904 = vdwg.mxu0
    %905 = vmatprep.subr.mxu0 %v732
    %906 = vmatpush1.msra.mxu0 %v731
    %907 = vmatprep.subr.mxu0 %v740
    %908 = vmatpush1.msra.mxu0 %v739
    %909 = vmatprep.subr.mxu0 0.0
    %910 = vmatpush1.msra.mxu0 0.0
    %911 = vmatprep.subr.mxu0 0.0
    %912 = vmatpush1.msra.mxu0 0.0
    %913 = vmatprep.subr.mxu0 0.0
    %914 = vmatpush1.msra.mxu0 0.0
    %915 = vmatprep.subr.mxu0 0.0
    %916 = vmatpush1.msra.mxu0 0.0
    %917 = vmatprep.subr.mxu0 0.0
    %918 = vmatpush1.msra.mxu0 0.0
    %919 = vmatprep.subr.mxu0 0.0
    %920 = vmatpush1.msra.mxu0 0.0
    %921 = vmatprep.subr.mxu0 0.0
    %922 = vmatpush1.msra.mxu0 0.0
    %923 = vmatprep.subr.mxu0 0.0
    %924 = vmatpush1.msra.mxu0 0.0
    %925 = vmatprep.subr.mxu0 0.0
    %926 = vmatpush1.msra.mxu0 0.0
    %927 = vmatprep.subr.mxu0 0.0
    %928 = vmatpush1.msra.mxu0 0.0
    %929 = vmatprep.subr.mxu0 0.0
    %930 = vmatpush1.msra.mxu0 0.0
    %931 = vmatprep.subr.mxu0 0.0
    %932 = vmatpush1.msra.mxu0 0.0
    %933 = vmatprep.subr.mxu0 0.0
    %934 = vmatpush1.msra.mxu0 0.0
    %935 = vmatprep.subr.mxu0 0.0
    %936 = vmatpush1.msra.mxu0 0.0
    %937 = vmatprep.subr.mxu0 0.0
    %938 = vmatpush1.msra.mxu0 0.0
    %939 = vmatprep.subr.mxu0 0.0
    %940 = vmatpush1.msra.mxu0 0.0
    %941 = vmatprep.subr.mxu0 0.0
    %942 = vmatpush1.msra.mxu0 0.0
    %943 = vmatprep.subr.mxu0 0.0
    %944 = vmatpush1.msra.mxu0 0.0
    %945 = vmatprep.subr.mxu0 0.0
    %946 = vmatpush1.msra.mxu0 0.0
    %947 = vmatprep.subr.mxu0 0.0
    %948 = vmatpush1.msra.mxu0 0.0
    %949 = vmatprep.subr.mxu0 0.0
    %950 = vmatpush1.msra.mxu0 0.0
    %951 = vmatprep.subr.mxu0 0.0
    %952 = vmatpush1.msra.mxu0 0.0
    %953 = vmatprep.subr.mxu0 0.0
    %954 = vmatpush1.msra.mxu0 0.0
    %955 = vmatprep.subr.mxu0 0.0
    %956 = vmatpush1.msra.mxu0 0.0
    %957 = vmatprep.subr.mxu0 0.0
    %958 = vmatpush1.msra.mxu0 0.0
    %959 = vmatprep.subr.mxu0 0.0
    %960 = vmatpush1.msra.mxu0 0.0
    %961 = vmatprep.subr.mxu0 0.0
    %962 = vmatpush1.msra.mxu0 0.0
    %963 = vmatprep.subr.mxu0 0.0
    %964 = vmatpush1.msra.mxu0 0.0
    %965 = vmatprep.subr.mxu0 0.0
    %966 = vmatpush1.msra.mxu0 0.0
    %967 = vmatprep.subr.mxu0 0.0
    %968 = vmatpush1.msra.mxu0 0.0
    %969 = vmatprep.mubr.f32.mxu0 0.0
    %970 = vmatmul.mubr.f32.gmra.mrb[0].mxu0 %v746
    %v971 = vpop.f32.mrb[0].mxu0
    %v972 = vadd.f32 0.0, %v971
    %v973 = vpop.f32.mrb[0].mxu0
    %v974 = vadd.f32 0.0, %v973
    %975 = vmatprep.mubr.f32.mxu0 0.0
    %976 = vmatmul.mubr.f32.gmra.mrb[0].mxu0 %v749
    %v977 = vpop.f32.mrb[0].mxu0
    %v978 = vadd.f32 0.0, %v977
    %v979 = vpop.f32.mrb[0].mxu0
    %v980 = vadd.f32 0.0, %v979
    %981 = vdwg.mxu0
    %982 = vmatprep.subr.mxu0 %v734
    %983 = vmatpush1.msra.mxu0 %v733
    %984 = vmatprep.subr.mxu0 %v742
    %985 = vmatpush1.msra.mxu0 %v741
    %986 = vmatprep.subr.mxu0 0.0
    %987 = vmatpush1.msra.mxu0 0.0
    %988 = vmatprep.subr.mxu0 0.0
    %989 = vmatpush1.msra.mxu0 0.0
    %990 = vmatprep.subr.mxu0 0.0
    %991 = vmatpush1.msra.mxu0 0.0
    %992 = vmatprep.subr.mxu0 0.0
    %993 = vmatpush1.msra.mxu0 0.0
    %994 = vmatprep.subr.mxu0 0.0
    %995 = vmatpush1.msra.mxu0 0.0
    %996 = vmatprep.subr.mxu0 0.0
    %997 = vmatpush1.msra.mxu0 0.0
    %998 = vmatprep.subr.mxu0 0.0
    %999 = vmatpush1.msra.mxu0 0.0
    %1000 = vmatprep.subr.mxu0 0.0
    %1001 = vmatpush1.msra.mxu0 0.0
    %1002 = vmatprep.subr.mxu0 0.0
    %1003 = vmatpush1.msra.mxu0 0.0
    %1004 = vmatprep.subr.mxu0 0.0
    %1005 = vmatpush1.msra.mxu0 0.0
    %1006 = vmatprep.subr.mxu0 0.0
    %1007 = vmatpush1.msra.mxu0 0.0
    %1008 = vmatprep.subr.mxu0 0.0
    %1009 = vmatpush1.msra.mxu0 0.0
    %1010 = vmatprep.subr.mxu0 0.0
    %1011 = vmatpush1.msra.mxu0 0.0
    %1012 = vmatprep.subr.mxu0 0.0
    %1013 = vmatpush1.msra.mxu0 0.0
    %1014 = vmatprep.subr.mxu0 0.0
    %1015 = vmatpush1.msra.mxu0 0.0
    %1016 = vmatprep.subr.mxu0 0.0
    %1017 = vmatpush1.msra.mxu0 0.0
    %1018 = vmatprep.subr.mxu0 0.0
    %1019 = vmatpush1.msra.mxu0 0.0
    %1020 = vmatprep.subr.mxu0 0.0
    %1021 = vmatpush1.msra.mxu0 0.0
    %1022 = vmatprep.subr.mxu0 0.0
    %1023 = vmatpush1.msra.mxu0 0.0
    %1024 = vmatprep.subr.mxu0 0.0
    %1025 = vmatpush1.msra.mxu0 0.0
    %1026 = vmatprep.subr.mxu0 0.0
    %1027 = vmatpush1.msra.mxu0 0.0
    %1028 = vmatprep.subr.mxu0 0.0
    %1029 = vmatpush1.msra.mxu0 0.0
    %1030 = vmatprep.subr.mxu0 0.0
    %1031 = vmatpush1.msra.mxu0 0.0
    %1032 = vmatprep.subr.mxu0 0.0
    %1033 = vmatpush1.msra.mxu0 0.0
    %1034 = vmatprep.subr.mxu0 0.0
    %1035 = vmatpush1.msra.mxu0 0.0
    %1036 = vmatprep.subr.mxu0 0.0
    %1037 = vmatpush1.msra.mxu0 0.0
    %1038 = vmatprep.subr.mxu0 0.0
    %1039 = vmatpush1.msra.mxu0 0.0
    %1040 = vmatprep.subr.mxu0 0.0
    %1041 = vmatpush1.msra.mxu0 0.0
    %1042 = vmatprep.subr.mxu0 0.0
    %1043 = vmatpush1.msra.mxu0 0.0
    %1044 = vmatprep.subr.mxu0 0.0
    %1045 = vmatpush1.msra.mxu0 0.0
    %1046 = vmatprep.mubr.f32.mxu0 0.0
    %1047 = vmatmul.mubr.f32.gmra.mrb[0].mxu0 %v746
    %v1048 = vpop.f32.mrb[0].mxu0
    %v1049 = vadd.f32 0.0, %v1048
    %v1050 = vpop.f32.mrb[0].mxu0
    %v1051 = vadd.f32 0.0, %v1050
    %1052 = vmatprep.mubr.f32.mxu0 0.0
    %1053 = vmatmul.mubr.f32.gmra.mrb[0].mxu0 %v749
    %v1054 = vpop.f32.mrb[0].mxu0
    %v1055 = vadd.f32 0.0, %v1054
    %v1056 = vpop.f32.mrb[0].mxu0
    %v1057 = vadd.f32 0.0, %v1056
    %1058 = vdwg.mxu0
    %v1059 = vadd.f32 %v818, %v107
    %v1060 = vadd.f32 %v824, %v108
    %v1061 = vadd.f32 %v820, %v109
    %v1062 = vadd.f32 %v826, %v110
    %v1063 = vadd.f32 %v895, %v111
    %v1064 = vadd.f32 %v901, %v112
    %v1065 = vadd.f32 %v897, %v113
    %v1066 = vadd.f32 %v903, %v114
    %v1067 = vadd.f32 %v972, %v115
    %v1068 = vadd.f32 %v978, %v116
    %v1069 = vadd.f32 %v974, %v117
    %v1070 = vadd.f32 %v980, %v118
    %v1071 = vadd.f32 %v1049, %v119
    %v1072 = vadd.f32 %v1055, %v120
    %v1073 = vadd.f32 %v1051, %v121
    %v1074 = vadd.f32 %v1057, %v122
    %v1075 = vld [vmem:[%s5] sm:$0x1]
    %v1076 = vld [vmem:[%s6] sm:$0x1]
    %1077 = vadd.xlane.f32.xlu0 %v1059
    %v1078 = vpop.xlane.xlu0 %1077
    %1079 = vadd.xlane.f32.xlu0 %v1060
    %v1080 = vpop.xlane.xlu0 %1079
    %1081 = vadd.xlane.f32.xlu0 %v1061
    %v1082 = vpop.xlane.xlu0 %1081
    %1083 = vadd.xlane.f32.xlu0 %v1062
    %v1084 = vpop.xlane.xlu0 %1083
    %1085 = vadd.xlane.f32.xlu0 %v1063
    %v1086 = vpop.xlane.xlu0 %1085
    %1087 = vadd.xlane.f32.xlu0 %v1064
    %v1088 = vpop.xlane.xlu0 %1087
    %1089 = vadd.xlane.f32.xlu0 %v1065
    %v1090 = vpop.xlane.xlu0 %1089
    %1091 = vadd.xlane.f32.xlu0 %v1066
    %v1092 = vpop.xlane.xlu0 %1091
    %1093 = vadd.xlane.f32.xlu0 %v1067
    %v1094 = vpop.xlane.xlu0 %1093
    %1095 = vadd.xlane.f32.xlu0 %v1068
    %v1096 = vpop.xlane.xlu0 %1095
    %1097 = vadd.xlane.f32.xlu0 %v1069
    %v1098 = vpop.xlane.xlu0 %1097
    %1099 = vadd.xlane.f32.xlu0 %v1070
    %v1100 = vpop.xlane.xlu0 %1099
    %1101 = vadd.xlane.f32.xlu0 %v1071
    %v1102 = vpop.xlane.xlu0 %1101
    %1103 = vadd.xlane.f32.xlu0 %v1072
    %v1104 = vpop.xlane.xlu0 %1103
    %1105 = vadd.xlane.f32.xlu0 %v1073
    %v1106 = vpop.xlane.xlu0 %1105
    %1107 = vadd.xlane.f32.xlu0 %v1074
    %v1108 = vpop.xlane.xlu0 %1107
    %v1109 = vmul.f32 %v1078, %v157
    %v1110 = vmul.f32 %v1080, %v157
    %v1111 = vmul.f32 %v1082, %v157
    %v1112 = vmul.f32 %v1084, %v157
    %v1113 = vmul.f32 %v1086, %v157
    %v1114 = vmul.f32 %v1088, %v157
    %v1115 = vmul.f32 %v1090, %v157
    %v1116 = vmul.f32 %v1092, %v157
    %v1117 = vmul.f32 %v1094, %v157
    %v1118 = vmul.f32 %v1096, %v157
    %v1119 = vmul.f32 %v1098, %v157
    %v1120 = vmul.f32 %v1100, %v157
    %v1121 = vmul.f32 %v1102, %v157
    %v1122 = vmul.f32 %v1104, %v157
    %v1123 = vmul.f32 %v1106, %v157
    %v1124 = vmul.f32 %v1108, %v157
    %v1125 = vsub.f32 %v1059, %v1109
    %v1126 = vsub.f32 %v1060, %v1110
    %v1127 = vsub.f32 %v1061, %v1111
    %v1128 = vsub.f32 %v1062, %v1112
    %v1129 = vsub.f32 %v1063, %v1113
    %v1130 = vsub.f32 %v1064, %v1114
    %v1131 = vsub.f32 %v1065, %v1115
    %v1132 = vsub.f32 %v1066, %v1116
    %v1133 = vsub.f32 %v1067, %v1117
    %v1134 = vsub.f32 %v1068, %v1118
    %v1135 = vsub.f32 %v1069, %v1119
    %v1136 = vsub.f32 %v1070, %v1120
    %v1137 = vsub.f32 %v1071, %v1121
    %v1138 = vsub.f32 %v1072, %v1122
    %v1139 = vsub.f32 %v1073, %v1123
    %v1140 = vsub.f32 %v1074, %v1124
    %v1141 = vmul.f32 %v1125, %v1125
    %v1142 = vmul.f32 %v1126, %v1126
    %v1143 = vmul.f32 %v1127, %v1127
    %v1144 = vmul.f32 %v1128, %v1128
    %v1145 = vmul.f32 %v1129, %v1129
    %v1146 = vmul.f32 %v1130, %v1130
    %v1147 = vmul.f32 %v1131, %v1131
    %v1148 = vmul.f32 %v1132, %v1132
    %v1149 = vmul.f32 %v1133, %v1133
    %v1150 = vmul.f32 %v1134, %v1134
    %v1151 = vmul.f32 %v1135, %v1135
    %v1152 = vmul.f32 %v1136, %v1136
    %v1153 = vmul.f32 %v1137, %v1137
    %v1154 = vmul.f32 %v1138, %v1138
    %v1155 = vmul.f32 %v1139, %v1139
    %v1156 = vmul.f32 %v1140, %v1140
    %1157 = vadd.xlane.f32.xlu0 %v1141
    %v1158 = vpop.xlane.xlu0 %1157
    %1159 = vadd.xlane.f32.xlu0 %v1142
    %v1160 = vpop.xlane.xlu0 %1159
    %1161 = vadd.xlane.f32.xlu0 %v1143
    %v1162 = vpop.xlane.xlu0 %1161
    %1163 = vadd.xlane.f32.xlu0 %v1144
    %v1164 = vpop.xlane.xlu0 %1163
    %1165 = vadd.xlane.f32.xlu0 %v1145
    %v1166 = vpop.xlane.xlu0 %1165
    %1167 = vadd.xlane.f32.xlu0 %v1146
    %v1168 = vpop.xlane.xlu0 %1167
    %1169 = vadd.xlane.f32.xlu0 %v1147
    %v1170 = vpop.xlane.xlu0 %1169
    %1171 = vadd.xlane.f32.xlu0 %v1148
    %v1172 = vpop.xlane.xlu0 %1171
    %1173 = vadd.xlane.f32.xlu0 %v1149
    %v1174 = vpop.xlane.xlu0 %1173
    %1175 = vadd.xlane.f32.xlu0 %v1150
    %v1176 = vpop.xlane.xlu0 %1175
    %1177 = vadd.xlane.f32.xlu0 %v1151
    %v1178 = vpop.xlane.xlu0 %1177
    %1179 = vadd.xlane.f32.xlu0 %v1152
    %v1180 = vpop.xlane.xlu0 %1179
    %1181 = vadd.xlane.f32.xlu0 %v1153
    %v1182 = vpop.xlane.xlu0 %1181
    %1183 = vadd.xlane.f32.xlu0 %v1154
    %v1184 = vpop.xlane.xlu0 %1183
    %1185 = vadd.xlane.f32.xlu0 %v1155
    %v1186 = vpop.xlane.xlu0 %1185
    %1187 = vadd.xlane.f32.xlu0 %v1156
    %v1188 = vpop.xlane.xlu0 %1187
    %v1189 = vmul.f32 %v1158, %v157
    %v1190 = vmul.f32 %v1160, %v157
    %v1191 = vmul.f32 %v1162, %v157
    %v1192 = vmul.f32 %v1164, %v157
    %v1193 = vmul.f32 %v1166, %v157
    %v1194 = vmul.f32 %v1168, %v157
    %v1195 = vmul.f32 %v1170, %v157
    %v1196 = vmul.f32 %v1172, %v157
    %v1197 = vmul.f32 %v1174, %v157
    %v1198 = vmul.f32 %v1176, %v157
    %v1199 = vmul.f32 %v1178, %v157
    %v1200 = vmul.f32 %v1180, %v157
    %v1201 = vmul.f32 %v1182, %v157
    %v1202 = vmul.f32 %v1184, %v157
    %v1203 = vmul.f32 %v1186, %v157
    %v1204 = vmul.f32 %v1188, %v157
    %v1205 = vadd.f32 %v1189, 1e-05
    %v1206 = vadd.f32 %v1190, 1e-05
    %v1207 = vadd.f32 %v1191, 1e-05
    %v1208 = vadd.f32 %v1192, 1e-05
    %v1209 = vadd.f32 %v1193, 1e-05
    %v1210 = vadd.f32 %v1194, 1e-05
    %v1211 = vadd.f32 %v1195, 1e-05
    %v1212 = vadd.f32 %v1196, 1e-05
    %v1213 = vadd.f32 %v1197, 1e-05
    %v1214 = vadd.f32 %v1198, 1e-05
    %v1215 = vadd.f32 %v1199, 1e-05
    %v1216 = vadd.f32 %v1200, 1e-05
    %v1217 = vadd.f32 %v1201, 1e-05
    %v1218 = vadd.f32 %v1202, 1e-05
    %v1219 = vadd.f32 %v1203, 1e-05
    %v1220 = vadd.f32 %v1204, 1e-05
    %v1221 = vrsqrt.pop %v1205
    %v1222 = vrsqrt.pop %v1206
    %v1223 = vrsqrt.pop %v1207
    %v1224 = vrsqrt.pop %v1208
    %v1225 = vrsqrt.pop %v1209
    %v1226 = vrsqrt.pop %v1210
    %v1227 = vrsqrt.pop %v1211
    %v1228 = vrsqrt.pop %v1212
    %v1229 = vrsqrt.pop %v1213
    %v1230 = vrsqrt.pop %v1214
    %v1231 = vrsqrt.pop %v1215
    %v1232 = vrsqrt.pop %v1216
    %v1233 = vrsqrt.pop %v1217
    %v1234 = vrsqrt.pop %v1218
    %v1235 = vrsqrt.pop %v1219
    %v1236 = vrsqrt.pop %v1220
    %v1237 = vmul.f32 %v1125, %v1221
    %v1238 = vmul.f32 %v1126, %v1222
    %v1239 = vmul.f32 %v1127, %v1223
    %v1240 = vmul.f32 %v1128, %v1224
    %v1241 = vmul.f32 %v1129, %v1225
    %v1242 = vmul.f32 %v1130, %v1226
    %v1243 = vmul.f32 %v1131, %v1227
    %v1244 = vmul.f32 %v1132, %v1228
    %v1245 = vmul.f32 %v1133, %v1229
    %v1246 = vmul.f32 %v1134, %v1230
    %v1247 = vmul.f32 %v1135, %v1231
    %v1248 = vmul.f32 %v1136, %v1232
    %v1249 = vmul.f32 %v1137, %v1233
    %v1250 = vmul.f32 %v1138, %v1234
    %v1251 = vmul.f32 %v1139, %v1235
    %v1252 = vmul.f32 %v1140, %v1236
    %v1254 = vlaneseq
    %v1255 = vshrl.u32 %v1254, 7
    %v1256 = vsub.s32 0, %v1255
    %v1257 = vrot.slane %v1075, %v1256
    %v1259 = vmul.f32 %v1237, %v1257
    %v1260 = vmul.f32 %v1238, %v1257
    %v1261 = vmul.f32 %v1239, %v1257
    %v1262 = vmul.f32 %v1240, %v1257
    %v1263 = vmul.f32 %v1241, %v1257
    %v1264 = vmul.f32 %v1242, %v1257
    %v1265 = vmul.f32 %v1243, %v1257
    %v1266 = vmul.f32 %v1244, %v1257
    %v1267 = vmul.f32 %v1245, %v1257
    %v1268 = vmul.f32 %v1246, %v1257
    %v1269 = vmul.f32 %v1247, %v1257
    %v1270 = vmul.f32 %v1248, %v1257
    %v1271 = vmul.f32 %v1249, %v1257
    %v1272 = vmul.f32 %v1250, %v1257
    %v1273 = vmul.f32 %v1251, %v1257
    %v1274 = vmul.f32 %v1252, %v1257
    %v1276 = vlaneseq
    %v1277 = vshrl.u32 %v1276, 7
    %v1278 = vsub.s32 0, %v1277
    %v1279 = vrot.slane %v1076, %v1278
    %v1281 = vadd.f32 %v1259, %v1279
    %v1282 = vadd.f32 %v1260, %v1279
    %v1283 = vadd.f32 %v1261, %v1279
    %v1284 = vadd.f32 %v1262, %v1279
    %v1285 = vadd.f32 %v1263, %v1279
    %v1286 = vadd.f32 %v1264, %v1279
    %v1287 = vadd.f32 %v1265, %v1279
    %v1288 = vadd.f32 %v1266, %v1279
    %v1289 = vadd.f32 %v1267, %v1279
    %v1290 = vadd.f32 %v1268, %v1279
    %v1291 = vadd.f32 %v1269, %v1279
    %v1292 = vadd.f32 %v1270, %v1279
    %v1293 = vadd.f32 %v1271, %v1279
    %v1294 = vadd.f32 %v1272, %v1279
    %v1295 = vadd.f32 %v1273, %v1279
    %v1296 = vadd.f32 %v1274, %v1279
    %v1297 = vld [vmem:[#allocation8] sm:$0xff]
    %v1298 = vld [vmem:[#allocation8 + $0x8] sm:$0xff]
    %v1299 = vld [vmem:[#allocation8 + $0x10] sm:$0xff]
    %v1300 = vld [vmem:[#allocation8 + $0x18] sm:$0xff]
    %v1301 = vld [vmem:[#allocation8 + $0x20] sm:$0xff]
    %v1302 = vld [vmem:[#allocation8 + $0x28] sm:$0xff]
    %v1303 = vld [vmem:[#allocation8 + $0x30] sm:$0xff]
    %v1304 = vld [vmem:[#allocation8 + $0x38] sm:$0xff]
    %v1305 = vld [vmem:[#allocation8 + $0x40] sm:$0xff]
    %v1306 = vld [vmem:[#allocation8 + $0x48] sm:$0xff]
    %v1307 = vld [vmem:[#allocation8 + $0x50] sm:$0xff]
    %v1308 = vld [vmem:[#allocation8 + $0x58] sm:$0xff]
    %v1309 = vld [vmem:[#allocation8 + $0x60] sm:$0xff]
    %v1310 = vld [vmem:[#allocation8 + $0x68] sm:$0xff]
    %v1311 = vld [vmem:[#allocation8 + $0x70] sm:$0xff]
    %v1312 = vld [vmem:[#allocation8 + $0x78] sm:$0xff]
    %v1313 = vld [vmem:[#allocation8 + $0x80] sm:$0xff]
    %v1314 = vld [vmem:[#allocation8 + $0x88] sm:$0xff]
    %v1315 = vld [vmem:[#allocation8 + $0x90] sm:$0xff]
    %v1316 = vld [vmem:[#allocation8 + $0x98] sm:$0xff]
    %v1317 = vld [vmem:[#allocation8 + $0xa0] sm:$0xff]
    %v1318 = vld [vmem:[#allocation8 + $0xa8] sm:$0xff]
    %v1319 = vld [vmem:[#allocation8 + $0xb0] sm:$0xff]
    %v1320 = vld [vmem:[#allocation8 + $0xb8] sm:$0xff]
    %v1321 = vld [vmem:[#allocation8 + $0xc0] sm:$0xff]
    %v1322 = vld [vmem:[#allocation8 + $0xc8] sm:$0xff]
    %v1323 = vld [vmem:[#allocation8 + $0xd0] sm:$0xff]
    %v1324 = vld [vmem:[#allocation8 + $0xd8] sm:$0xff]
    %v1325 = vld [vmem:[#allocation8 + $0xe0] sm:$0xff]
    %v1326 = vld [vmem:[#allocation8 + $0xe8] sm:$0xff]
    %v1327 = vld [vmem:[#allocation8 + $0xf0] sm:$0xff]
    %v1328 = vld [vmem:[#allocation8 + $0xf8] sm:$0xff]
    %v1329 = vld [vmem:[#allocation8 + $0x100] sm:$0xff]
    %v1330 = vld [vmem:[#allocation8 + $0x108] sm:$0xff]
    %v1331 = vld [vmem:[#allocation8 + $0x110] sm:$0xff]
    %v1332 = vld [vmem:[#allocation8 + $0x118] sm:$0xff]
    %v1333 = vld [vmem:[#allocation8 + $0x120] sm:$0xff]
    %v1334 = vld [vmem:[#allocation8 + $0x128] sm:$0xff]
    %v1335 = vld [vmem:[#allocation8 + $0x130] sm:$0xff]
    %v1336 = vld [vmem:[#allocation8 + $0x138] sm:$0xff]
    %v1337 = vld [vmem:[#allocation8 + $0x140] sm:$0xff]
    %v1338 = vld [vmem:[#allocation8 + $0x148] sm:$0xff]
    %v1339 = vld [vmem:[#allocation8 + $0x150] sm:$0xff]
    %v1340 = vld [vmem:[#allocation8 + $0x158] sm:$0xff]
    %v1341 = vld [vmem:[#allocation8 + $0x160] sm:$0xff]
    %v1342 = vld [vmem:[#allocation8 + $0x168] sm:$0xff]
    %v1343 = vld [vmem:[#allocation8 + $0x170] sm:$0xff]
    %v1344 = vld [vmem:[#allocation8 + $0x178] sm:$0xff]
    %v1345 = vld [vmem:[#allocation8 + $0x180] sm:$0xff]
    %v1346 = vld [vmem:[#allocation8 + $0x188] sm:$0xff]
    %v1347 = vld [vmem:[#allocation8 + $0x190] sm:$0xff]
    %v1348 = vld [vmem:[#allocation8 + $0x198] sm:$0xff]
    %v1349 = vld [vmem:[#allocation8 + $0x1a0] sm:$0xff]
    %v1350 = vld [vmem:[#allocation8 + $0x1a8] sm:$0xff]
    %v1351 = vld [vmem:[#allocation8 + $0x1b0] sm:$0xff]
    %v1352 = vld [vmem:[#allocation8 + $0x1b8] sm:$0xff]
    %v1353 = vld [vmem:[#allocation8 + $0x1c0] sm:$0xff]
    %v1354 = vld [vmem:[#allocation8 + $0x1c8] sm:$0xff]
    %v1355 = vld [vmem:[#allocation8 + $0x1d0] sm:$0xff]
    %v1356 = vld [vmem:[#allocation8 + $0x1d8] sm:$0xff]
    %v1357 = vld [vmem:[#allocation8 + $0x1e0] sm:$0xff]
    %v1358 = vld [vmem:[#allocation8 + $0x1e8] sm:$0xff]
    %v1359 = vld [vmem:[#allocation8 + $0x1f0] sm:$0xff]
    %v1360 = vld [vmem:[#allocation8 + $0x1f8] sm:$0xff]
    %v1361 = vld [vmem:[%s8] sm:$0xf]
    %v1363 = vlaneseq
    %v1364 = vshrl.u32 %v1363, 7
    %v1365 = vsub.s32 0, %v1364
    %v1366 = vrot.slane %v1361, %v1365
    %v1367 = vlaneseq
    %v1368 = vshrl.u32 %v1367, 7
    %v1369 = vsub.s32 1, %v1368
    %v1370 = vrot.slane %v1361, %v1369
    %v1371 = vlaneseq
    %v1372 = vshrl.u32 %v1371, 7
    %v1373 = vsub.s32 2, %v1372
    %v1374 = vrot.slane %v1361, %v1373
    %v1375 = vlaneseq
    %v1376 = vshrl.u32 %v1375, 7
    %v1377 = vsub.s32 3, %v1376
    %v1378 = vrot.slane %v1361, %v1377
    %1383 = vmatprep.subr.mxu0 %v1298
    %1384 = vmatpush1.msra.mxu0 %v1297
    %1385 = vmatprep.subr.mxu0 %v1302
    %1386 = vmatpush1.msra.mxu0 %v1301
    %1387 = vmatprep.subr.mxu0 %v1306
    %1388 = vmatpush1.msra.mxu0 %v1305
    %1389 = vmatprep.subr.mxu0 %v1310
    %1390 = vmatpush1.msra.mxu0 %v1309
    %1391 = vmatprep.subr.mxu0 %v1314
    %1392 = vmatpush1.msra.mxu0 %v1313
    %1393 = vmatprep.subr.mxu0 %v1318
    %1394 = vmatpush1.msra.mxu0 %v1317
    %1395 = vmatprep.subr.mxu0 %v1322
    %1396 = vmatpush1.msra.mxu0 %v1321
    %1397 = vmatprep.subr.mxu0 %v1326
    %1398 = vmatpush1.msra.mxu0 %v1325
    %1399 = vmatprep.subr.mxu0 %v1330
    %1400 = vmatpush1.msra.mxu0 %v1329
    %1401 = vmatprep.subr.mxu0 %v1334
    %1402 = vmatpush1.msra.mxu0 %v1333
    %1403 = vmatprep.subr.mxu0 %v1338
    %1404 = vmatpush1.msra.mxu0 %v1337
    %1405 = vmatprep.subr.mxu0 %v1342
    %1406 = vmatpush1.msra.mxu0 %v1341
    %1407 = vmatprep.subr.mxu0 %v1346
    %1408 = vmatpush1.msra.mxu0 %v1345
    %1409 = vmatprep.subr.mxu0 %v1350
    %1410 = vmatpush1.msra.mxu0 %v1349
    %1411 = vmatprep.subr.mxu0 %v1354
    %1412 = vmatpush1.msra.mxu0 %v1353
    %1413 = vmatprep.subr.mxu0 %v1358
    %1414 = vmatpush1.msra.mxu0 %v1357
    %1415 = vmatprep.subr.mxu0 0.0
    %1416 = vmatpush1.msra.mxu0 0.0
    %1417 = vmatprep.subr.mxu0 0.0
    %1418 = vmatpush1.msra.mxu0 0.0
    %1419 = vmatprep.subr.mxu0 0.0
    %1420 = vmatpush1.msra.mxu0 0.0
    %1421 = vmatprep.subr.mxu0 0.0
    %1422 = vmatpush1.msra.mxu0 0.0
    %1423 = vmatprep.subr.mxu0 0.0
    %1424 = vmatpush1.msra.mxu0 0.0
    %1425 = vmatprep.subr.mxu0 0.0
    %1426 = vmatpush1.msra.mxu0 0.0
    %1427 = vmatprep.subr.mxu0 0.0
    %1428 = vmatpush1.msra.mxu0 0.0
    %1429 = vmatprep.subr.mxu0 0.0
    %1430 = vmatpush1.msra.mxu0 0.0
    %1431 = vmatprep.subr.mxu0 0.0
    %1432 = vmatpush1.msra.mxu0 0.0
    %1433 = vmatprep.subr.mxu0 0.0
    %1434 = vmatpush1.msra.mxu0 0.0
    %1435 = vmatprep.subr.mxu0 0.0
    %1436 = vmatpush1.msra.mxu0 0.0
    %1437 = vmatprep.subr.mxu0 0.0
    %1438 = vmatpush1.msra.mxu0 0.0
    %1439 = vmatprep.subr.mxu0 0.0
    %1440 = vmatpush1.msra.mxu0 0.0
    %1441 = vmatprep.subr.mxu0 0.0
    %1442 = vmatpush1.msra.mxu0 0.0
    %1443 = vmatprep.subr.mxu0 0.0
    %1444 = vmatpush1.msra.mxu0 0.0
    %1445 = vmatprep.subr.mxu0 0.0
    %1446 = vmatpush1.msra.mxu0 0.0
    %1447 = vmatprep.mubr.f32.mxu0 0.0
    %1448 = vmatmul.mubr.f32.gmra.mrb[0].mxu0 %v1281
    %v1449 = vpop.f32.mrb[0].mxu0
    %v1450 = vadd.f32 %v1366, %v1449
    %v1451 = vpop.f32.mrb[0].mxu0
    %v1452 = vadd.f32 %v1370, %v1451
    %1453 = vmatprep.mubr.f32.mxu0 0.0
    %1454 = vmatmul.mubr.f32.gmra.mrb[0].mxu0 %v1282
    %v1455 = vpop.f32.mrb[0].mxu0
    %v1456 = vadd.f32 %v1366, %v1455
    %v1457 = vpop.f32.mrb[0].mxu0
    %v1458 = vadd.f32 %v1370, %v1457
    %1459 = vmatprep.mubr.f32.mxu0 0.0
    %1460 = vmatmul.mubr.f32.gmra.mrb[0].mxu0 %v1283
    %v1461 = vpop.f32.mrb[0].mxu0
    %v1462 = vadd.f32 %v1366, %v1461
    %v1463 = vpop.f32.mrb[0].mxu0
    %v1464 = vadd.f32 %v1370, %v1463
    %1465 = vmatprep.mubr.f32.mxu0 0.0
    %1466 = vmatmul.mubr.f32.gmra.mrb[0].mxu0 %v1284
    %v1467 = vpop.f32.mrb[0].mxu0
    %v1468 = vadd.f32 %v1366, %v1467
    %v1469 = vpop.f32.mrb[0].mxu0
    %v1470 = vadd.f32 %v1370, %v1469
    %1471 = vmatprep.mubr.f32.mxu0 0.0
    %1472 = vmatmul.mubr.f32.gmra.mrb[0].mxu0 %v1285
    %v1473 = vpop.f32.mrb[0].mxu0
    %v1474 = vadd.f32 %v1366, %v1473
    %v1475 = vpop.f32.mrb[0].mxu0
    %v1476 = vadd.f32 %v1370, %v1475
    %1477 = vmatprep.mubr.f32.mxu0 0.0
    %1478 = vmatmul.mubr.f32.gmra.mrb[0].mxu0 %v1286
    %v1479 = vpop.f32.mrb[0].mxu0
    %v1480 = vadd.f32 %v1366, %v1479
    %v1481 = vpop.f32.mrb[0].mxu0
    %v1482 = vadd.f32 %v1370, %v1481
    %1483 = vmatprep.mubr.f32.mxu0 0.0
    %1484 = vmatmul.mubr.f32.gmra.mrb[0].mxu0 %v1287
    %v1485 = vpop.f32.mrb[0].mxu0
    %v1486 = vadd.f32 %v1366, %v1485
    %v1487 = vpop.f32.mrb[0].mxu0
    %v1488 = vadd.f32 %v1370, %v1487
    %1489 = vmatprep.mubr.f32.mxu0 0.0
    %1490 = vmatmul.mubr.f32.gmra.mrb[0].mxu0 %v1288
    %v1491 = vpop.f32.mrb[0].mxu0
    %v1492 = vadd.f32 %v1366, %v1491
    %v1493 = vpop.f32.mrb[0].mxu0
    %v1494 = vadd.f32 %v1370, %v1493
    %1495 = vmatprep.mubr.f32.mxu0 0.0
    %1496 = vmatmul.mubr.f32.gmra.mrb[0].mxu0 %v1289
    %v1497 = vpop.f32.mrb[0].mxu0
    %v1498 = vadd.f32 %v1366, %v1497
    %v1499 = vpop.f32.mrb[0].mxu0
    %v1500 = vadd.f32 %v1370, %v1499
    %1501 = vmatprep.mubr.f32.mxu0 0.0
    %1502 = vmatmul.mubr.f32.gmra.mrb[0].mxu0 %v1290
    %v1503 = vpop.f32.mrb[0].mxu0
    %v1504 = vadd.f32 %v1366, %v1503
    %v1505 = vpop.f32.mrb[0].mxu0
    %v1506 = vadd.f32 %v1370, %v1505
    %1507 = vmatprep.mubr.f32.mxu0 0.0
    %1508 = vmatmul.mubr.f32.gmra.mrb[0].mxu0 %v1291
    %v1509 = vpop.f32.mrb[0].mxu0
    %v1510 = vadd.f32 %v1366, %v1509
    %v1511 = vpop.f32.mrb[0].mxu0
    %v1512 = vadd.f32 %v1370, %v1511
    %1513 = vmatprep.mubr.f32.mxu0 0.0
    %1514 = vmatmul.mubr.f32.gmra.mrb[0].mxu0 %v1292
    %v1515 = vpop.f32.mrb[0].mxu0
    %v1516 = vadd.f32 %v1366, %v1515
    %v1517 = vpop.f32.mrb[0].mxu0
    %v1518 = vadd.f32 %v1370, %v1517
    %1519 = vmatprep.mubr.f32.mxu0 0.0
    %1520 = vmatmul.mubr.f32.gmra.mrb[0].mxu0 %v1293
    %v1521 = vpop.f32.mrb[0].mxu0
    %v1522 = vadd.f32 %v1366, %v1521
    %v1523 = vpop.f32.mrb[0].mxu0
    %v1524 = vadd.f32 %v1370, %v1523
    %1525 = vmatprep.mubr.f32.mxu0 0.0
    %1526 = vmatmul.mubr.f32.gmra.mrb[0].mxu0 %v1294
    %v1527 = vpop.f32.mrb[0].mxu0
    %v1528 = vadd.f32 %v1366, %v1527
    %v1529 = vpop.f32.mrb[0].mxu0
    %v1530 = vadd.f32 %v1370, %v1529
    %1531 = vmatprep.mubr.f32.mxu0 0.0
    %1532 = vmatmul.mubr.f32.gmra.mrb[0].mxu0 %v1295
    %v1533 = vpop.f32.mrb[0].mxu0
    %v1534 = vadd.f32 %v1366, %v1533
    %v1535 = vpop.f32.mrb[0].mxu0
    %v1536 = vadd.f32 %v1370, %v1535
    %1537 = vmatprep.mubr.f32.mxu0 0.0
    %1538 = vmatmul.mubr.f32.gmra.mrb[0].mxu0 %v1296
    %v1539 = vpop.f32.mrb[0].mxu0
    %v1540 = vadd.f32 %v1366, %v1539
    %v1541 = vpop.f32.mrb[0].mxu0
    %v1542 = vadd.f32 %v1370, %v1541
    %1543 = vdwg.mxu0
    %1544 = vmatprep.subr.mxu0 %v1300
    %1545 = vmatpush1.msra.mxu0 %v1299
    %1546 = vmatprep.subr.mxu0 %v1304
    %1547 = vmatpush1.msra.mxu0 %v1303
    %1548 = vmatprep.subr.mxu0 %v1308
    %1549 = vmatpush1.msra.mxu0 %v1307
    %1550 = vmatprep.subr.mxu0 %v1312
    %1551 = vmatpush1.msra.mxu0 %v1311
    %1552 = vmatprep.subr.mxu0 %v1316
    %1553 = vmatpush1.msra.mxu0 %v1315
    %1554 = vmatprep.subr.mxu0 %v1320
    %1555 = vmatpush1.msra.mxu0 %v1319
    %1556 = vmatprep.subr.mxu0 %v1324
    %1557 = vmatpush1.msra.mxu0 %v1323
    %1558 = vmatprep.subr.mxu0 %v1328
    %1559 = vmatpush1.msra.mxu0 %v1327
    %1560 = vmatprep.subr.mxu0 %v1332
    %1561 = vmatpush1.msra.mxu0 %v1331
    %1562 = vmatprep.subr.mxu0 %v1336
    %1563 = vmatpush1.msra.mxu0 %v1335
    %1564 = vmatprep.subr.mxu0 %v1340
    %1565 = vmatpush1.msra.mxu0 %v1339
    %1566 = vmatprep.subr.mxu0 %v1344
    %1567 = vmatpush1.msra.mxu0 %v1343
    %1568 = vmatprep.subr.mxu0 %v1348
    %1569 = vmatpush1.msra.mxu0 %v1347
    %1570 = vmatprep.subr.mxu0 %v1352
    %1571 = vmatpush1.msra.mxu0 %v1351
    %1572 = vmatprep.subr.mxu0 %v1356
    %1573 = vmatpush1.msra.mxu0 %v1355
    %1574 = vmatprep.subr.mxu0 %v1360
    %1575 = vmatpush1.msra.mxu0 %v1359
    %1576 = vmatprep.subr.mxu0 0.0
    %1577 = vmatpush1.msra.mxu0 0.0
    %1578 = vmatprep.subr.mxu0 0.0
    %1579 = vmatpush1.msra.mxu0 0.0
    %1580 = vmatprep.subr.mxu0 0.0
    %1581 = vmatpush1.msra.mxu0 0.0
    %1582 = vmatprep.subr.mxu0 0.0
    %1583 = vmatpush1.msra.mxu0 0.0
    %1584 = vmatprep.subr.mxu0 0.0
    %1585 = vmatpush1.msra.mxu0 0.0
    %1586 = vmatprep.subr.mxu0 0.0
    %1587 = vmatpush1.msra.mxu0 0.0
    %1588 = vmatprep.subr.mxu0 0.0
    %1589 = vmatpush1.msra.mxu0 0.0
    %1590 = vmatprep.subr.mxu0 0.0
    %1591 = vmatpush1.msra.mxu0 0.0
    %1592 = vmatprep.subr.mxu0 0.0
    %1593 = vmatpush1.msra.mxu0 0.0
    %1594 = vmatprep.subr.mxu0 0.0
    %1595 = vmatpush1.msra.mxu0 0.0
    %1596 = vmatprep.subr.mxu0 0.0
    %1597 = vmatpush1.msra.mxu0 0.0
    %1598 = vmatprep.subr.mxu0 0.0
    %1599 = vmatpush1.msra.mxu0 0.0
    %1600 = vmatprep.subr.mxu0 0.0
    %1601 = vmatpush1.msra.mxu0 0.0
    %1602 = vmatprep.subr.mxu0 0.0
    %1603 = vmatpush1.msra.mxu0 0.0
    %1604 = vmatprep.subr.mxu0 0.0
    %1605 = vmatpush1.msra.mxu0 0.0
    %1606 = vmatprep.subr.mxu0 0.0
    %1607 = vmatpush1.msra.mxu0 0.0
    %1608 = vmatprep.mubr.f32.mxu0 0.0
    %1609 = vmatmul.mubr.f32.gmra.mrb[0].mxu0 %v1281
    %v1610 = vpop.f32.mrb[0].mxu0
    %v1611 = vadd.f32 %v1374, %v1610
    %v1612 = vpop.f32.mrb[0].mxu0
    %v1613 = vadd.f32 %v1378, %v1612
    %1614 = vmatprep.mubr.f32.mxu0 0.0
    %1615 = vmatmul.mubr.f32.gmra.mrb[0].mxu0 %v1282
    %v1616 = vpop.f32.mrb[0].mxu0
    %v1617 = vadd.f32 %v1374, %v1616
    %v1618 = vpop.f32.mrb[0].mxu0
    %v1619 = vadd.f32 %v1378, %v1618
    %1620 = vmatprep.mubr.f32.mxu0 0.0
    %1621 = vmatmul.mubr.f32.gmra.mrb[0].mxu0 %v1283
    %v1622 = vpop.f32.mrb[0].mxu0
    %v1623 = vadd.f32 %v1374, %v1622
    %v1624 = vpop.f32.mrb[0].mxu0
    %v1625 = vadd.f32 %v1378, %v1624
    %1626 = vmatprep.mubr.f32.mxu0 0.0
    %1627 = vmatmul.mubr.f32.gmra.mrb[0].mxu0 %v1284
    %v1628 = vpop.f32.mrb[0].mxu0
    %v1629 = vadd.f32 %v1374, %v1628
    %v1630 = vpop.f32.mrb[0].mxu0
    %v1631 = vadd.f32 %v1378, %v1630
    %1632 = vmatprep.mubr.f32.mxu0 0.0
    %1633 = vmatmul.mubr.f32.gmra.mrb[0].mxu0 %v1285
    %v1634 = vpop.f32.mrb[0].mxu0
    %v1635 = vadd.f32 %v1374, %v1634
    %v1636 = vpop.f32.mrb[0].mxu0
    %v1637 = vadd.f32 %v1378, %v1636
    %1638 = vmatprep.mubr.f32.mxu0 0.0
    %1639 = vmatmul.mubr.f32.gmra.mrb[0].mxu0 %v1286
    %v1640 = vpop.f32.mrb[0].mxu0
    %v1641 = vadd.f32 %v1374, %v1640
    %v1642 = vpop.f32.mrb[0].mxu0
    %v1643 = vadd.f32 %v1378, %v1642
    %1644 = vmatprep.mubr.f32.mxu0 0.0
    %1645 = vmatmul.mubr.f32.gmra.mrb[0].mxu0 %v1287
    %v1646 = vpop.f32.mrb[0].mxu0
    %v1647 = vadd.f32 %v1374, %v1646
    %v1648 = vpop.f32.mrb[0].mxu0
    %v1649 = vadd.f32 %v1378, %v1648
    %1650 = vmatprep.mubr.f32.mxu0 0.0
    %1651 = vmatmul.mubr.f32.gmra.mrb[0].mxu0 %v1288
    %v1652 = vpop.f32.mrb[0].mxu0
    %v1653 = vadd.f32 %v1374, %v1652
    %v1654 = vpop.f32.mrb[0].mxu0
    %v1655 = vadd.f32 %v1378, %v1654
    %1656 = vmatprep.mubr.f32.mxu0 0.0
    %1657 = vmatmul.mubr.f32.gmra.mrb[0].mxu0 %v1289
    %v1658 = vpop.f32.mrb[0].mxu0
    %v1659 = vadd.f32 %v1374, %v1658
    %v1660 = vpop.f32.mrb[0].mxu0
    %v1661 = vadd.f32 %v1378, %v1660
    %1662 = vmatprep.mubr.f32.mxu0 0.0
    %1663 = vmatmul.mubr.f32.gmra.mrb[0].mxu0 %v1290
    %v1664 = vpop.f32.mrb[0].mxu0
    %v1665 = vadd.f32 %v1374, %v1664
    %v1666 = vpop.f32.mrb[0].mxu0
    %v1667 = vadd.f32 %v1378, %v1666
    %1668 = vmatprep.mubr.f32.mxu0 0.0
    %1669 = vmatmul.mubr.f32.gmra.mrb[0].mxu0 %v1291
    %v1670 = vpop.f32.mrb[0].mxu0
    %v1671 = vadd.f32 %v1374, %v1670
    %v1672 = vpop.f32.mrb[0].mxu0
    %v1673 = vadd.f32 %v1378, %v1672
    %1674 = vmatprep.mubr.f32.mxu0 0.0
    %1675 = vmatmul.mubr.f32.gmra.mrb[0].mxu0 %v1292
    %v1676 = vpop.f32.mrb[0].mxu0
    %v1677 = vadd.f32 %v1374, %v1676
    %v1678 = vpop.f32.mrb[0].mxu0
    %v1679 = vadd.f32 %v1378, %v1678
    %1680 = vmatprep.mubr.f32.mxu0 0.0
    %1681 = vmatmul.mubr.f32.gmra.mrb[0].mxu0 %v1293
    %v1682 = vpop.f32.mrb[0].mxu0
    %v1683 = vadd.f32 %v1374, %v1682
    %v1684 = vpop.f32.mrb[0].mxu0
    %v1685 = vadd.f32 %v1378, %v1684
    %1686 = vmatprep.mubr.f32.mxu0 0.0
    %1687 = vmatmul.mubr.f32.gmra.mrb[0].mxu0 %v1294
    %v1688 = vpop.f32.mrb[0].mxu0
    %v1689 = vadd.f32 %v1374, %v1688
    %v1690 = vpop.f32.mrb[0].mxu0
    %v1691 = vadd.f32 %v1378, %v1690
    %1692 = vmatprep.mubr.f32.mxu0 0.0
    %1693 = vmatmul.mubr.f32.gmra.mrb[0].mxu0 %v1295
    %v1694 = vpop.f32.mrb[0].mxu0
    %v1695 = vadd.f32 %v1374, %v1694
    %v1696 = vpop.f32.mrb[0].mxu0
    %v1697 = vadd.f32 %v1378, %v1696
    %1698 = vmatprep.mubr.f32.mxu0 0.0
    %1699 = vmatmul.mubr.f32.gmra.mrb[0].mxu0 %v1296
    %v1700 = vpop.f32.mrb[0].mxu0
    %v1701 = vadd.f32 %v1374, %v1700
    %v1702 = vpop.f32.mrb[0].mxu0
    %v1703 = vadd.f32 %v1378, %v1702
    %1704 = vdwg.mxu0
    %v1705 = vmul.f32 %v1450, 0.5
    %v1706 = vmul.f32 %v1452, 0.5
    %v1707 = vmul.f32 %v1611, 0.5
    %v1708 = vmul.f32 %v1613, 0.5
    %v1709 = vmul.f32 %v1456, 0.5
    %v1710 = vmul.f32 %v1458, 0.5
    %v1711 = vmul.f32 %v1617, 0.5
    %v1712 = vmul.f32 %v1619, 0.5
    %v1713 = vmul.f32 %v1462, 0.5
    %v1714 = vmul.f32 %v1464, 0.5
    %v1715 = vmul.f32 %v1623, 0.5
    %v1716 = vmul.f32 %v1625, 0.5
    %v1717 = vmul.f32 %v1468, 0.5
    %v1718 = vmul.f32 %v1470, 0.5
    %v1719 = vmul.f32 %v1629, 0.5
    %v1720 = vmul.f32 %v1631, 0.5
    %v1721 = vmul.f32 %v1474, 0.5
    %v1722 = vmul.f32 %v1476, 0.5
    %v1723 = vmul.f32 %v1635, 0.5
    %v1724 = vmul.f32 %v1637, 0.5
    %v1725 = vmul.f32 %v1480, 0.5
    %v1726 = vmul.f32 %v1482, 0.5
    %v1727 = vmul.f32 %v1641, 0.5
    %v1728 = vmul.f32 %v1643, 0.5
    %v1729 = vmul.f32 %v1486, 0.5
    %v1730 = vmul.f32 %v1488, 0.5
    %v1731 = vmul.f32 %v1647, 0.5
    %v1732 = vmul.f32 %v1649, 0.5
    %v1733 = vmul.f32 %v1492, 0.5
    %v1734 = vmul.f32 %v1494, 0.5
    %v1735 = vmul.f32 %v1653, 0.5
    %v1736 = vmul.f32 %v1655, 0.5
    %v1737 = vmul.f32 %v1498, 0.5
    %v1738 = vmul.f32 %v1500, 0.5
    %v1739 = vmul.f32 %v1659, 0.5
    %v1740 = vmul.f32 %v1661, 0.5
    %v1741 = vmul.f32 %v1504, 0.5
    %v1742 = vmul.f32 %v1506, 0.5
    %v1743 = vmul.f32 %v1665, 0.5
    %v1744 = vmul.f32 %v1667, 0.5
    %v1745 = vmul.f32 %v1510, 0.5
    %v1746 = vmul.f32 %v1512, 0.5
    %v1747 = vmul.f32 %v1671, 0.5
    %v1748 = vmul.f32 %v1673, 0.5
    %v1749 = vmul.f32 %v1516, 0.5
    %v1750 = vmul.f32 %v1518, 0.5
    %v1751 = vmul.f32 %v1677, 0.5
    %v1752 = vmul.f32 %v1679, 0.5
    %v1753 = vmul.f32 %v1522, 0.5
    %v1754 = vmul.f32 %v1524, 0.5
    %v1755 = vmul.f32 %v1683, 0.5
    %v1756 = vmul.f32 %v1685, 0.5
    %v1757 = vmul.f32 %v1528, 0.5
    %v1758 = vmul.f32 %v1530, 0.5
    %v1759 = vmul.f32 %v1689, 0.5
    %v1760 = vmul.f32 %v1691, 0.5
    %v1761 = vmul.f32 %v1534, 0.5
    %v1762 = vmul.f32 %v1536, 0.5
    %v1763 = vmul.f32 %v1695, 0.5
    %v1764 = vmul.f32 %v1697, 0.5
    %v1765 = vmul.f32 %v1540, 0.5
    %v1766 = vmul.f32 %v1542, 0.5
    %v1767 = vmul.f32 %v1701, 0.5
    %v1768 = vmul.f32 %v1703, 0.5
    %v1769 = vmul.f32 %v1450, 0.70710677
    %v1770 = vmul.f32 %v1452, 0.70710677
    %v1771 = vmul.f32 %v1611, 0.70710677
    %v1772 = vmul.f32 %v1613, 0.70710677
    %v1773 = vmul.f32 %v1456, 0.70710677
    %v1774 = vmul.f32 %v1458, 0.70710677
    %v1775 = vmul.f32 %v1617, 0.70710677
    %v1776 = vmul.f32 %v1619, 0.70710677
    %v1777 = vmul.f32 %v1462, 0.70710677
    %v1778 = vmul.f32 %v1464, 0.70710677
    %v1779 = vmul.f32 %v1623, 0.70710677
    %v1780 = vmul.f32 %v1625, 0.70710677
    %v1781 = vmul.f32 %v1468, 0.70710677
    %v1782 = vmul.f32 %v1470, 0.70710677
    %v1783 = vmul.f32 %v1629, 0.70710677
    %v1784 = vmul.f32 %v1631, 0.70710677
    %v1785 = vmul.f32 %v1474, 0.70710677
    %v1786 = vmul.f32 %v1476, 0.70710677
    %v1787 = vmul.f32 %v1635, 0.70710677
    %v1788 = vmul.f32 %v1637, 0.70710677
    %v1789 = vmul.f32 %v1480, 0.70710677
    %v1790 = vmul.f32 %v1482, 0.70710677
    %v1791 = vmul.f32 %v1641, 0.70710677
    %v1792 = vmul.f32 %v1643, 0.70710677
    %v1793 = vmul.f32 %v1486, 0.70710677
    %v1794 = vmul.f32 %v1488, 0.70710677
    %v1795 = vmul.f32 %v1647, 0.70710677
    %v1796 = vmul.f32 %v1649, 0.70710677
    %v1797 = vmul.f32 %v1492, 0.70710677
    %v1798 = vmul.f32 %v1494, 0.70710677
    %v1799 = vmul.f32 %v1653, 0.70710677
    %v1800 = vmul.f32 %v1655, 0.70710677
    %v1801 = vmul.f32 %v1498, 0.70710677
    %v1802 = vmul.f32 %v1500, 0.70710677
    %v1803 = vmul.f32 %v1659, 0.70710677
    %v1804 = vmul.f32 %v1661, 0.70710677
    %v1805 = vmul.f32 %v1504, 0.70710677
    %v1806 = vmul.f32 %v1506, 0.70710677
    %v1807 = vmul.f32 %v1665, 0.70710677
    %v1808 = vmul.f32 %v1667, 0.70710677
    %v1809 = vmul.f32 %v1510, 0.70710677
    %v1810 = vmul.f32 %v1512, 0.70710677
    %v1811 = vmul.f32 %v1671, 0.70710677
    %v1812 = vmul.f32 %v1673, 0.70710677
    %v1813 = vmul.f32 %v1516, 0.70710677
    %v1814 = vmul.f32 %v1518, 0.70710677
    %v1815 = vmul.f32 %v1677, 0.70710677
    %v1816 = vmul.f32 %v1679, 0.70710677
    %v1817 = vmul.f32 %v1522, 0.70710677
    %v1818 = vmul.f32 %v1524, 0.70710677
    %v1819 = vmul.f32 %v1683, 0.70710677
    %v1820 = vmul.f32 %v1685, 0.70710677
    %v1821 = vmul.f32 %v1528, 0.70710677
    %v1822 = vmul.f32 %v1530, 0.70710677
    %v1823 = vmul.f32 %v1689, 0.70710677
    %v1824 = vmul.f32 %v1691, 0.70710677
    %v1825 = vmul.f32 %v1534, 0.70710677
    %v1826 = vmul.f32 %v1536, 0.70710677
    %v1827 = vmul.f32 %v1695, 0.70710677
    %v1828 = vmul.f32 %v1697, 0.70710677
    %v1829 = vmul.f32 %v1540, 0.70710677
    %v1830 = vmul.f32 %v1542, 0.70710677
    %v1831 = vmul.f32 %v1701, 0.70710677
    %v1832 = vmul.f32 %v1703, 0.70710677
    %v1833 = verf.f32.pop %v1769
    %v1834 = verf.f32.pop %v1770
    %v1835 = verf.f32.pop %v1771
    %v1836 = verf.f32.pop %v1772
    %v1837 = verf.f32.pop %v1773
    %v1838 = verf.f32.pop %v1774
    %v1839 = verf.f32.pop %v1775
    %v1840 = verf.f32.pop %v1776
    %v1841 = verf.f32.pop %v1777
    %v1842 = verf.f32.pop %v1778
    %v1843 = verf.f32.pop %v1779
    %v1844 = verf.f32.pop %v1780
    %v1845 = verf.f32.pop %v1781
    %v1846 = verf.f32.pop %v1782
    %v1847 = verf.f32.pop %v1783
    %v1848 = verf.f32.pop %v1784
    %v1849 = verf.f32.pop %v1785
    %v1850 = verf.f32.pop %v1786
    %v1851 = verf.f32.pop %v1787
    %v1852 = verf.f32.pop %v1788
    %v1853 = verf.f32.pop %v1789
    %v1854 = verf.f32.pop %v1790
    %v1855 = verf.f32.pop %v1791
    %v1856 = verf.f32.pop %v1792
    %v1857 = verf.f32.pop %v1793
    %v1858 = verf.f32.pop %v1794
    %v1859 = verf.f32.pop %v1795
    %v1860 = verf.f32.pop %v1796
    %v1861 = verf.f32.pop %v1797
    %v1862 = verf.f32.pop %v1798
    %v1863 = verf.f32.pop %v1799
    %v1864 = verf.f32.pop %v1800
    %v1865 = verf.f32.pop %v1801
    %v1866 = verf.f32.pop %v1802
    %v1867 = verf.f32.pop %v1803
    %v1868 = verf.f32.pop %v1804
    %v1869 = verf.f32.pop %v1805
    %v1870 = verf.f32.pop %v1806
    %v1871 = verf.f32.pop %v1807
    %v1872 = verf.f32.pop %v1808
    %v1873 = verf.f32.pop %v1809
    %v1874 = verf.f32.pop %v1810
    %v1875 = verf.f32.pop %v1811
    %v1876 = verf.f32.pop %v1812
    %v1877 = verf.f32.pop %v1813
    %v1878 = verf.f32.pop %v1814
    %v1879 = verf.f32.pop %v1815
    %v1880 = verf.f32.pop %v1816
    %v1881 = verf.f32.pop %v1817
    %v1882 = verf.f32.pop %v1818
    %v1883 = verf.f32.pop %v1819
    %v1884 = verf.f32.pop %v1820
    %v1885 = verf.f32.pop %v1821
    %v1886 = verf.f32.pop %v1822
    %v1887 = verf.f32.pop %v1823
    %v1888 = verf.f32.pop %v1824
    %v1889 = verf.f32.pop %v1825
    %v1890 = verf.f32.pop %v1826
    %v1891 = verf.f32.pop %v1827
    %v1892 = verf.f32.pop %v1828
    %v1893 = verf.f32.pop %v1829
    %v1894 = verf.f32.pop %v1830
    %v1895 = verf.f32.pop %v1831
    %v1896 = verf.f32.pop %v1832
    %v1897 = vadd.f32 %v1833, 1.0
    %v1898 = vadd.f32 %v1834, 1.0
    %v1899 = vadd.f32 %v1835, 1.0
    %v1900 = vadd.f32 %v1836, 1.0
    %v1901 = vadd.f32 %v1837, 1.0
    %v1902 = vadd.f32 %v1838, 1.0
    %v1903 = vadd.f32 %v1839, 1.0
    %v1904 = vadd.f32 %v1840, 1.0
    %v1905 = vadd.f32 %v1841, 1.0
    %v1906 = vadd.f32 %v1842, 1.0
    %v1907 = vadd.f32 %v1843, 1.0
    %v1908 = vadd.f32 %v1844, 1.0
    %v1909 = vadd.f32 %v1845, 1.0
    %v1910 = vadd.f32 %v1846, 1.0
    %v1911 = vadd.f32 %v1847, 1.0
    %v1912 = vadd.f32 %v1848, 1.0
    %v1913 = vadd.f32 %v1849, 1.0
    %v1914 = vadd.f32 %v1850, 1.0
    %v1915 = vadd.f32 %v1851, 1.0
    %v1916 = vadd.f32 %v1852, 1.0
    %v1917 = vadd.f32 %v1853, 1.0
    %v1918 = vadd.f32 %v1854, 1.0
    %v1919 = vadd.f32 %v1855, 1.0
    %v1920 = vadd.f32 %v1856, 1.0
    %v1921 = vadd.f32 %v1857, 1.0
    %v1922 = vadd.f32 %v1858, 1.0
    %v1923 = vadd.f32 %v1859, 1.0
    %v1924 = vadd.f32 %v1860, 1.0
    %v1925 = vadd.f32 %v1861, 1.0
    %v1926 = vadd.f32 %v1862, 1.0
    %v1927 = vadd.f32 %v1863, 1.0
    %v1928 = vadd.f32 %v1864, 1.0
    %v1929 = vadd.f32 %v1865, 1.0
    %v1930 = vadd.f32 %v1866, 1.0
    %v1931 = vadd.f32 %v1867, 1.0
    %v1932 = vadd.f32 %v1868, 1.0
    %v1933 = vadd.f32 %v1869, 1.0
    %v1934 = vadd.f32 %v1870, 1.0
    %v1935 = vadd.f32 %v1871, 1.0
    %v1936 = vadd.f32 %v1872, 1.0
    %v1937 = vadd.f32 %v1873, 1.0
    %v1938 = vadd.f32 %v1874, 1.0
    %v1939 = vadd.f32 %v1875, 1.0
    %v1940 = vadd.f32 %v1876, 1.0
    %v1941 = vadd.f32 %v1877, 1.0
    %v1942 = vadd.f32 %v1878, 1.0
    %v1943 = vadd.f32 %v1879, 1.0
    %v1944 = vadd.f32 %v1880, 1.0
    %v1945 = vadd.f32 %v1881, 1.0
    %v1946 = vadd.f32 %v1882, 1.0
    %v1947 = vadd.f32 %v1883, 1.0
    %v1948 = vadd.f32 %v1884, 1.0
    %v1949 = vadd.f32 %v1885, 1.0
    %v1950 = vadd.f32 %v1886, 1.0
    %v1951 = vadd.f32 %v1887, 1.0
    %v1952 = vadd.f32 %v1888, 1.0
    %v1953 = vadd.f32 %v1889, 1.0
    %v1954 = vadd.f32 %v1890, 1.0
    %v1955 = vadd.f32 %v1891, 1.0
    %v1956 = vadd.f32 %v1892, 1.0
    %v1957 = vadd.f32 %v1893, 1.0
    %v1958 = vadd.f32 %v1894, 1.0
    %v1959 = vadd.f32 %v1895, 1.0
    %v1960 = vadd.f32 %v1896, 1.0
    %v1961 = vmul.f32 %v1705, %v1897
    %v1962 = vmul.f32 %v1706, %v1898
    %v1963 = vmul.f32 %v1707, %v1899
    %v1964 = vmul.f32 %v1708, %v1900
    %v1965 = vmul.f32 %v1709, %v1901
    %v1966 = vmul.f32 %v1710, %v1902
    %v1967 = vmul.f32 %v1711, %v1903
    %v1968 = vmul.f32 %v1712, %v1904
    %v1969 = vmul.f32 %v1713, %v1905
    %v1970 = vmul.f32 %v1714, %v1906
    %v1971 = vmul.f32 %v1715, %v1907
    %v1972 = vmul.f32 %v1716, %v1908
    %v1973 = vmul.f32 %v1717, %v1909
    %v1974 = vmul.f32 %v1718, %v1910
    %v1975 = vmul.f32 %v1719, %v1911
    %v1976 = vmul.f32 %v1720, %v1912
    %v1977 = vmul.f32 %v1721, %v1913
    %v1978 = vmul.f32 %v1722, %v1914
    %v1979 = vmul.f32 %v1723, %v1915
    %v1980 = vmul.f32 %v1724, %v1916
    %v1981 = vmul.f32 %v1725, %v1917
    %v1982 = vmul.f32 %v1726, %v1918
    %v1983 = vmul.f32 %v1727, %v1919
    %v1984 = vmul.f32 %v1728, %v1920
    %v1985 = vmul.f32 %v1729, %v1921
    %v1986 = vmul.f32 %v1730, %v1922
    %v1987 = vmul.f32 %v1731, %v1923
    %v1988 = vmul.f32 %v1732, %v1924
    %v1989 = vmul.f32 %v1733, %v1925
    %v1990 = vmul.f32 %v1734, %v1926
    %v1991 = vmul.f32 %v1735, %v1927
    %v1992 = vmul.f32 %v1736, %v1928
    %v1993 = vmul.f32 %v1737, %v1929
    %v1994 = vmul.f32 %v1738, %v1930
    %v1995 = vmul.f32 %v1739, %v1931
    %v1996 = vmul.f32 %v1740, %v1932
    %v1997 = vmul.f32 %v1741, %v1933
    %v1998 = vmul.f32 %v1742, %v1934
    %v1999 = vmul.f32 %v1743, %v1935
    %v2000 = vmul.f32 %v1744, %v1936
    %v2001 = vmul.f32 %v1745, %v1937
    %v2002 = vmul.f32 %v1746, %v1938
    %v2003 = vmul.f32 %v1747, %v1939
    %v2004 = vmul.f32 %v1748, %v1940
    %v2005 = vmul.f32 %v1749, %v1941
    %v2006 = vmul.f32 %v1750, %v1942
    %v2007 = vmul.f32 %v1751, %v1943
    %v2008 = vmul.f32 %v1752, %v1944
    %v2009 = vmul.f32 %v1753, %v1945
    %v2010 = vmul.f32 %v1754, %v1946
    %v2011 = vmul.f32 %v1755, %v1947
    %v2012 = vmul.f32 %v1756, %v1948
    %v2013 = vmul.f32 %v1757, %v1949
    %v2014 = vmul.f32 %v1758, %v1950
    %v2015 = vmul.f32 %v1759, %v1951
    %v2016 = vmul.f32 %v1760, %v1952
    %v2017 = vmul.f32 %v1761, %v1953
    %v2018 = vmul.f32 %v1762, %v1954
    %v2019 = vmul.f32 %v1763, %v1955
    %v2020 = vmul.f32 %v1764, %v1956
    %v2021 = vmul.f32 %v1765, %v1957
    %v2022 = vmul.f32 %v1766, %v1958
    %v2023 = vmul.f32 %v1767, %v1959
    %v2024 = vmul.f32 %v1768, %v1960
    %v2025 = vld [vmem:[#allocation10] sm:$0xff]
    %v2026 = vld [vmem:[#allocation10 + $0x8] sm:$0xff]
    %v2027 = vld [vmem:[#allocation10 + $0x10] sm:$0xff]
    %v2028 = vld [vmem:[#allocation10 + $0x18] sm:$0xff]
    %v2029 = vld [vmem:[#allocation10 + $0x20] sm:$0xff]
    %v2030 = vld [vmem:[#allocation10 + $0x28] sm:$0xff]
    %v2031 = vld [vmem:[#allocation10 + $0x30] sm:$0xff]
    %v2032 = vld [vmem:[#allocation10 + $0x38] sm:$0xff]
    %v2033 = vld [vmem:[#allocation10 + $0x40] sm:$0xff]
    %v2034 = vld [vmem:[#allocation10 + $0x48] sm:$0xff]
    %v2035 = vld [vmem:[#allocation10 + $0x50] sm:$0xff]
    %v2036 = vld [vmem:[#allocation10 + $0x58] sm:$0xff]
    %v2037 = vld [vmem:[#allocation10 + $0x60] sm:$0xff]
    %v2038 = vld [vmem:[#allocation10 + $0x68] sm:$0xff]
    %v2039 = vld [vmem:[#allocation10 + $0x70] sm:$0xff]
    %v2040 = vld [vmem:[#allocation10 + $0x78] sm:$0xff]
    %v2041 = vld [vmem:[#allocation10 + $0x80] sm:$0xff]
    %v2042 = vld [vmem:[#allocation10 + $0x88] sm:$0xff]
    %v2043 = vld [vmem:[#allocation10 + $0x90] sm:$0xff]
    %v2044 = vld [vmem:[#allocation10 + $0x98] sm:$0xff]
    %v2045 = vld [vmem:[#allocation10 + $0xa0] sm:$0xff]
    %v2046 = vld [vmem:[#allocation10 + $0xa8] sm:$0xff]
    %v2047 = vld [vmem:[#allocation10 + $0xb0] sm:$0xff]
    %v2048 = vld [vmem:[#allocation10 + $0xb8] sm:$0xff]
    %v2049 = vld [vmem:[#allocation10 + $0xc0] sm:$0xff]
    %v2050 = vld [vmem:[#allocation10 + $0xc8] sm:$0xff]
    %v2051 = vld [vmem:[#allocation10 + $0xd0] sm:$0xff]
    %v2052 = vld [vmem:[#allocation10 + $0xd8] sm:$0xff]
    %v2053 = vld [vmem:[#allocation10 + $0xe0] sm:$0xff]
    %v2054 = vld [vmem:[#allocation10 + $0xe8] sm:$0xff]
    %v2055 = vld [vmem:[#allocation10 + $0xf0] sm:$0xff]
    %v2056 = vld [vmem:[#allocation10 + $0xf8] sm:$0xff]
    %v2057 = vld [vmem:[#allocation10 + $0x100] sm:$0xff]
    %v2058 = vld [vmem:[#allocation10 + $0x108] sm:$0xff]
    %v2059 = vld [vmem:[#allocation10 + $0x110] sm:$0xff]
    %v2060 = vld [vmem:[#allocation10 + $0x118] sm:$0xff]
    %v2061 = vld [vmem:[#allocation10 + $0x120] sm:$0xff]
    %v2062 = vld [vmem:[#allocation10 + $0x128] sm:$0xff]
    %v2063 = vld [vmem:[#allocation10 + $0x130] sm:$0xff]
    %v2064 = vld [vmem:[#allocation10 + $0x138] sm:$0xff]
    %v2065 = vld [vmem:[#allocation10 + $0x140] sm:$0xff]
    %v2066 = vld [vmem:[#allocation10 + $0x148] sm:$0xff]
    %v2067 = vld [vmem:[#allocation10 + $0x150] sm:$0xff]
    %v2068 = vld [vmem:[#allocation10 + $0x158] sm:$0xff]
    %v2069 = vld [vmem:[#allocation10 + $0x160] sm:$0xff]
    %v2070 = vld [vmem:[#allocation10 + $0x168] sm:$0xff]
    %v2071 = vld [vmem:[#allocation10 + $0x170] sm:$0xff]
    %v2072 = vld [vmem:[#allocation10 + $0x178] sm:$0xff]
    %v2073 = vld [vmem:[#allocation10 + $0x180] sm:$0xff]
    %v2074 = vld [vmem:[#allocation10 + $0x188] sm:$0xff]
    %v2075 = vld [vmem:[#allocation10 + $0x190] sm:$0xff]
    %v2076 = vld [vmem:[#allocation10 + $0x198] sm:$0xff]
    %v2077 = vld [vmem:[#allocation10 + $0x1a0] sm:$0xff]
    %v2078 = vld [vmem:[#allocation10 + $0x1a8] sm:$0xff]
    %v2079 = vld [vmem:[#allocation10 + $0x1b0] sm:$0xff]
    %v2080 = vld [vmem:[#allocation10 + $0x1b8] sm:$0xff]
    %v2081 = vld [vmem:[#allocation10 + $0x1c0] sm:$0xff]
    %v2082 = vld [vmem:[#allocation10 + $0x1c8] sm:$0xff]
    %v2083 = vld [vmem:[#allocation10 + $0x1d0] sm:$0xff]
    %v2084 = vld [vmem:[#allocation10 + $0x1d8] sm:$0xff]
    %v2085 = vld [vmem:[#allocation10 + $0x1e0] sm:$0xff]
    %v2086 = vld [vmem:[#allocation10 + $0x1e8] sm:$0xff]
    %v2087 = vld [vmem:[#allocation10 + $0x1f0] sm:$0xff]
    %v2088 = vld [vmem:[#allocation10 + $0x1f8] sm:$0xff]
    %v2089 = vld [vmem:[%s10] sm:$0x1]
    %v2091 = vlaneseq
    %v2092 = vshrl.u32 %v2091, 7
    %v2093 = vsub.s32 0, %v2092
    %v2094 = vrot.slane %v2089, %v2093
    %2096 = vmatprep.subr.mxu0 0.0
    %2097 = vmatpush1.msra.mxu0 %v2025
    %2098 = vmatprep.subr.mxu0 0.0
    %2099 = vmatpush1.msra.mxu0 %v2026
    %2100 = vmatprep.subr.mxu0 0.0
    %2101 = vmatpush1.msra.mxu0 %v2027
    %2102 = vmatprep.subr.mxu0 0.0
    %2103 = vmatpush1.msra.mxu0 %v2028
    %2104 = vmatprep.subr.mxu0 0.0
    %2105 = vmatpush1.msra.mxu0 %v2029
    %2106 = vmatprep.subr.mxu0 0.0
    %2107 = vmatpush1.msra.mxu0 %v2030
    %2108 = vmatprep.subr.mxu0 0.0
    %2109 = vmatpush1.msra.mxu0 %v2031
    %2110 = vmatprep.subr.mxu0 0.0
    %2111 = vmatpush1.msra.mxu0 %v2032
    %2112 = vmatprep.subr.mxu0 0.0
    %2113 = vmatpush1.msra.mxu0 %v2033
    %2114 = vmatprep.subr.mxu0 0.0
    %2115 = vmatpush1.msra.mxu0 %v2034
    %2116 = vmatprep.subr.mxu0 0.0
    %2117 = vmatpush1.msra.mxu0 %v2035
    %2118 = vmatprep.subr.mxu0 0.0
    %2119 = vmatpush1.msra.mxu0 %v2036
    %2120 = vmatprep.subr.mxu0 0.0
    %2121 = vmatpush1.msra.mxu0 %v2037
    %2122 = vmatprep.subr.mxu0 0.0
    %2123 = vmatpush1.msra.mxu0 %v2038
    %2124 = vmatprep.subr.mxu0 0.0
    %2125 = vmatpush1.msra.mxu0 %v2039
    %2126 = vmatprep.subr.mxu0 0.0
    %2127 = vmatpush1.msra.mxu0 %v2040
    %2128 = vmatprep.subr.mxu0 0.0
    %2129 = vmatpush1.msra.mxu0 %v2041
    %2130 = vmatprep.subr.mxu0 0.0
    %2131 = vmatpush1.msra.mxu0 %v2042
    %2132 = vmatprep.subr.mxu0 0.0
    %2133 = vmatpush1.msra.mxu0 %v2043
    %2134 = vmatprep.subr.mxu0 0.0
    %2135 = vmatpush1.msra.mxu0 %v2044
    %2136 = vmatprep.subr.mxu0 0.0
    %2137 = vmatpush1.msra.mxu0 %v2045
    %2138 = vmatprep.subr.mxu0 0.0
    %2139 = vmatpush1.msra.mxu0 %v2046
    %2140 = vmatprep.subr.mxu0 0.0
    %2141 = vmatpush1.msra.mxu0 %v2047
    %2142 = vmatprep.subr.mxu0 0.0
    %2143 = vmatpush1.msra.mxu0 %v2048
    %2144 = vmatprep.subr.mxu0 0.0
    %2145 = vmatpush1.msra.mxu0 %v2049
    %2146 = vmatprep.subr.mxu0 0.0
    %2147 = vmatpush1.msra.mxu0 %v2050
    %2148 = vmatprep.subr.mxu0 0.0
    %2149 = vmatpush1.msra.mxu0 %v2051
    %2150 = vmatprep.subr.mxu0 0.0
    %2151 = vmatpush1.msra.mxu0 %v2052
    %2152 = vmatprep.subr.mxu0 0.0
    %2153 = vmatpush1.msra.mxu0 %v2053
    %2154 = vmatprep.subr.mxu0 0.0
    %2155 = vmatpush1.msra.mxu0 %v2054
    %2156 = vmatprep.subr.mxu0 0.0
    %2157 = vmatpush1.msra.mxu0 %v2055
    %2158 = vmatprep.subr.mxu0 0.0
    %2159 = vmatpush1.msra.mxu0 %v2056
    %2160 = vmatprep.mubr.f32.mxu0 %v1962
    %2161 = vmatmul.mubr.f32.gmra.mrb[0].mxu0 %v1961
    %v2162 = vpop.f32.mrb[0].mxu0
    %v2163 = vadd.f32 %v2094, %v2162
    %v2164 = vpop.f32.mrb[0].mxu0
    %2165 = vmatprep.mubr.f32.mxu0 %v1966
    %2166 = vmatmul.mubr.f32.gmra.mrb[0].mxu0 %v1965
    %v2167 = vpop.f32.mrb[0].mxu0
    %v2168 = vadd.f32 %v2094, %v2167
    %v2169 = vpop.f32.mrb[0].mxu0
    %2170 = vmatprep.mubr.f32.mxu0 %v1970
    %2171 = vmatmul.mubr.f32.gmra.mrb[0].mxu0 %v1969
    %v2172 = vpop.f32.mrb[0].mxu0
    %v2173 = vadd.f32 %v2094, %v2172
    %v2174 = vpop.f32.mrb[0].mxu0
    %2175 = vmatprep.mubr.f32.mxu0 %v1974
    %2176 = vmatmul.mubr.f32.gmra.mrb[0].mxu0 %v1973
    %v2177 = vpop.f32.mrb[0].mxu0
    %v2178 = vadd.f32 %v2094, %v2177
    %v2179 = vpop.f32.mrb[0].mxu0
    %2180 = vmatprep.mubr.f32.mxu0 %v1978
    %2181 = vmatmul.mubr.f32.gmra.mrb[0].mxu0 %v1977
    %v2182 = vpop.f32.mrb[0].mxu0
    %v2183 = vadd.f32 %v2094, %v2182
    %v2184 = vpop.f32.mrb[0].mxu0
    %2185 = vmatprep.mubr.f32.mxu0 %v1982
    %2186 = vmatmul.mubr.f32.gmra.mrb[0].mxu0 %v1981
    %v2187 = vpop.f32.mrb[0].mxu0
    %v2188 = vadd.f32 %v2094, %v2187
    %v2189 = vpop.f32.mrb[0].mxu0
    %2190 = vmatprep.mubr.f32.mxu0 %v1986
    %2191 = vmatmul.mubr.f32.gmra.mrb[0].mxu0 %v1985
    %v2192 = vpop.f32.mrb[0].mxu0
    %v2193 = vadd.f32 %v2094, %v2192
    %v2194 = vpop.f32.mrb[0].mxu0
    %2195 = vmatprep.mubr.f32.mxu0 %v1990
    %2196 = vmatmul.mubr.f32.gmra.mrb[0].mxu0 %v1989
    %v2197 = vpop.f32.mrb[0].mxu0
    %v2198 = vadd.f32 %v2094, %v2197
    %v2199 = vpop.f32.mrb[0].mxu0
    %2200 = vmatprep.mubr.f32.mxu0 %v1994
    %2201 = vmatmul.mubr.f32.gmra.mrb[0].mxu0 %v1993
    %v2202 = vpop.f32.mrb[0].mxu0
    %v2203 = vadd.f32 %v2094, %v2202
    %v2204 = vpop.f32.mrb[0].mxu0
    %2205 = vmatprep.mubr.f32.mxu0 %v1998
    %2206 = vmatmul.mubr.f32.gmra.mrb[0].mxu0 %v1997
    %v2207 = vpop.f32.mrb[0].mxu0
    %v2208 = vadd.f32 %v2094, %v2207
    %v2209 = vpop.f32.mrb[0].mxu0
    %2210 = vmatprep.mubr.f32.mxu0 %v2002
    %2211 = vmatmul.mubr.f32.gmra.mrb[0].mxu0 %v2001
    %v2212 = vpop.f32.mrb[0].mxu0
    %v2213 = vadd.f32 %v2094, %v2212
    %v2214 = vpop.f32.mrb[0].mxu0
    %2215 = vmatprep.mubr.f32.mxu0 %v2006
    %2216 = vmatmul.mubr.f32.gmra.mrb[0].mxu0 %v2005
    %v2217 = vpop.f32.mrb[0].mxu0
    %v2218 = vadd.f32 %v2094, %v2217
    %v2219 = vpop.f32.mrb[0].mxu0
    %2220 = vmatprep.mubr.f32.mxu0 %v2010
    %2221 = vmatmul.mubr.f32.gmra.mrb[0].mxu0 %v2009
    %v2222 = vpop.f32.mrb[0].mxu0
    %v2223 = vadd.f32 %v2094, %v2222
    %v2224 = vpop.f32.mrb[0].mxu0
    %2225 = vmatprep.mubr.f32.mxu0 %v2014
    %2226 = vmatmul.mubr.f32.gmra.mrb[0].mxu0 %v2013
    %v2227 = vpop.f32.mrb[0].mxu0
    %v2228 = vadd.f32 %v2094, %v2227
    %v2229 = vpop.f32.mrb[0].mxu0
    %2230 = vmatprep.mubr.f32.mxu0 %v2018
    %2231 = vmatmul.mubr.f32.gmra.mrb[0].mxu0 %v2017
    %v2232 = vpop.f32.mrb[0].mxu0
    %v2233 = vadd.f32 %v2094, %v2232
    %v2234 = vpop.f32.mrb[0].mxu0
    %2235 = vmatprep.mubr.f32.mxu0 %v2022
    %2236 = vmatmul.mubr.f32.gmra.mrb[0].mxu0 %v2021
    %v2237 = vpop.f32.mrb[0].mxu0
    %v2238 = vadd.f32 %v2094, %v2237
    %v2239 = vpop.f32.mrb[0].mxu0
    %2240 = vdwg.mxu0
    %2241 = vmatprep.subr.mxu0 0.0
    %2242 = vmatpush1.msra.mxu0 %v2057
    %2243 = vmatprep.subr.mxu0 0.0
    %2244 = vmatpush1.msra.mxu0 %v2058
    %2245 = vmatprep.subr.mxu0 0.0
    %2246 = vmatpush1.msra.mxu0 %v2059
    %2247 = vmatprep.subr.mxu0 0.0
    %2248 = vmatpush1.msra.mxu0 %v2060
    %2249 = vmatprep.subr.mxu0 0.0
    %2250 = vmatpush1.msra.mxu0 %v2061
    %2251 = vmatprep.subr.mxu0 0.0
    %2252 = vmatpush1.msra.mxu0 %v2062
    %2253 = vmatprep.subr.mxu0 0.0
    %2254 = vmatpush1.msra.mxu0 %v2063
    %2255 = vmatprep.subr.mxu0 0.0
    %2256 = vmatpush1.msra.mxu0 %v2064
    %2257 = vmatprep.subr.mxu0 0.0
    %2258 = vmatpush1.msra.mxu0 %v2065
    %2259 = vmatprep.subr.mxu0 0.0
    %2260 = vmatpush1.msra.mxu0 %v2066
    %2261 = vmatprep.subr.mxu0 0.0
    %2262 = vmatpush1.msra.mxu0 %v2067
    %2263 = vmatprep.subr.mxu0 0.0
    %2264 = vmatpush1.msra.mxu0 %v2068
    %2265 = vmatprep.subr.mxu0 0.0
    %2266 = vmatpush1.msra.mxu0 %v2069
    %2267 = vmatprep.subr.mxu0 0.0
    %2268 = vmatpush1.msra.mxu0 %v2070
    %2269 = vmatprep.subr.mxu0 0.0
    %2270 = vmatpush1.msra.mxu0 %v2071
    %2271 = vmatprep.subr.mxu0 0.0
    %2272 = vmatpush1.msra.mxu0 %v2072
    %2273 = vmatprep.subr.mxu0 0.0
    %2274 = vmatpush1.msra.mxu0 %v2073
    %2275 = vmatprep.subr.mxu0 0.0
    %2276 = vmatpush1.msra.mxu0 %v2074
    %2277 = vmatprep.subr.mxu0 0.0
    %2278 = vmatpush1.msra.mxu0 %v2075
    %2279 = vmatprep.subr.mxu0 0.0
    %2280 = vmatpush1.msra.mxu0 %v2076
    %2281 = vmatprep.subr.mxu0 0.0
    %2282 = vmatpush1.msra.mxu0 %v2077
    %2283 = vmatprep.subr.mxu0 0.0
    %2284 = vmatpush1.msra.mxu0 %v2078
    %2285 = vmatprep.subr.mxu0 0.0
    %2286 = vmatpush1.msra.mxu0 %v2079
    %2287 = vmatprep.subr.mxu0 0.0
    %2288 = vmatpush1.msra.mxu0 %v2080
    %2289 = vmatprep.subr.mxu0 0.0
    %2290 = vmatpush1.msra.mxu0 %v2081
    %2291 = vmatprep.subr.mxu0 0.0
    %2292 = vmatpush1.msra.mxu0 %v2082
    %2293 = vmatprep.subr.mxu0 0.0
    %2294 = vmatpush1.msra.mxu0 %v2083
    %2295 = vmatprep.subr.mxu0 0.0
    %2296 = vmatpush1.msra.mxu0 %v2084
    %2297 = vmatprep.subr.mxu0 0.0
    %2298 = vmatpush1.msra.mxu0 %v2085
    %2299 = vmatprep.subr.mxu0 0.0
    %2300 = vmatpush1.msra.mxu0 %v2086
    %2301 = vmatprep.subr.mxu0 0.0
    %2302 = vmatpush1.msra.mxu0 %v2087
    %2303 = vmatprep.subr.mxu0 0.0
    %2304 = vmatpush1.msra.mxu0 %v2088
    %2305 = vmatprep.mubr.f32.mxu0 %v1964
    %2306 = vmatmul.mubr.f32.gmra.mrb[0].mxu0 %v1963
    %v2307 = vpop.f32.mrb[0].mxu0
    %v2308 = vadd.f32 %v2163, %v2307
    %v2309 = vpop.f32.mrb[0].mxu0
    %2310 = vmatprep.mubr.f32.mxu0 %v1968
    %2311 = vmatmul.mubr.f32.gmra.mrb[0].mxu0 %v1967
    %v2312 = vpop.f32.mrb[0].mxu0
    %v2313 = vadd.f32 %v2168, %v2312
    %v2314 = vpop.f32.mrb[0].mxu0
    %2315 = vmatprep.mubr.f32.mxu0 %v1972
    %2316 = vmatmul.mubr.f32.gmra.mrb[0].mxu0 %v1971
    %v2317 = vpop.f32.mrb[0].mxu0
    %v2318 = vadd.f32 %v2173, %v2317
    %v2319 = vpop.f32.mrb[0].mxu0
    %2320 = vmatprep.mubr.f32.mxu0 %v1976
    %2321 = vmatmul.mubr.f32.gmra.mrb[0].mxu0 %v1975
    %v2322 = vpop.f32.mrb[0].mxu0
    %v2323 = vadd.f32 %v2178, %v2322
    %v2324 = vpop.f32.mrb[0].mxu0
    %2325 = vmatprep.mubr.f32.mxu0 %v1980
    %2326 = vmatmul.mubr.f32.gmra.mrb[0].mxu0 %v1979
    %v2327 = vpop.f32.mrb[0].mxu0
    %v2328 = vadd.f32 %v2183, %v2327
    %v2329 = vpop.f32.mrb[0].mxu0
    %2330 = vmatprep.mubr.f32.mxu0 %v1984
    %2331 = vmatmul.mubr.f32.gmra.mrb[0].mxu0 %v1983
    %v2332 = vpop.f32.mrb[0].mxu0
    %v2333 = vadd.f32 %v2188, %v2332
    %v2334 = vpop.f32.mrb[0].mxu0
    %2335 = vmatprep.mubr.f32.mxu0 %v1988
    %2336 = vmatmul.mubr.f32.gmra.mrb[0].mxu0 %v1987
    %v2337 = vpop.f32.mrb[0].mxu0
    %v2338 = vadd.f32 %v2193, %v2337
    %v2339 = vpop.f32.mrb[0].mxu0
    %2340 = vmatprep.mubr.f32.mxu0 %v1992
    %2341 = vmatmul.mubr.f32.gmra.mrb[0].mxu0 %v1991
    %v2342 = vpop.f32.mrb[0].mxu0
    %v2343 = vadd.f32 %v2198, %v2342
    %v2344 = vpop.f32.mrb[0].mxu0
    %2345 = vmatprep.mubr.f32.mxu0 %v1996
    %2346 = vmatmul.mubr.f32.gmra.mrb[0].mxu0 %v1995
    %v2347 = vpop.f32.mrb[0].mxu0
    %v2348 = vadd.f32 %v2203, %v2347
    %v2349 = vpop.f32.mrb[0].mxu0
    %2350 = vmatprep.mubr.f32.mxu0 %v2000
    %2351 = vmatmul.mubr.f32.gmra.mrb[0].mxu0 %v1999
    %v2352 = vpop.f32.mrb[0].mxu0
    %v2353 = vadd.f32 %v2208, %v2352
    %v2354 = vpop.f32.mrb[0].mxu0
    %2355 = vmatprep.mubr.f32.mxu0 %v2004
    %2356 = vmatmul.mubr.f32.gmra.mrb[0].mxu0 %v2003
    %v2357 = vpop.f32.mrb[0].mxu0
    %v2358 = vadd.f32 %v2213, %v2357
    %v2359 = vpop.f32.mrb[0].mxu0
    %2360 = vmatprep.mubr.f32.mxu0 %v2008
    %2361 = vmatmul.mubr.f32.gmra.mrb[0].mxu0 %v2007
    %v2362 = vpop.f32.mrb[0].mxu0
    %v2363 = vadd.f32 %v2218, %v2362
    %v2364 = vpop.f32.mrb[0].mxu0
    %2365 = vmatprep.mubr.f32.mxu0 %v2012
    %2366 = vmatmul.mubr.f32.gmra.mrb[0].mxu0 %v2011
    %v2367 = vpop.f32.mrb[0].mxu0
    %v2368 = vadd.f32 %v2223, %v2367
    %v2369 = vpop.f32.mrb[0].mxu0
    %2370 = vmatprep.mubr.f32.mxu0 %v2016
    %2371 = vmatmul.mubr.f32.gmra.mrb[0].mxu0 %v2015
    %v2372 = vpop.f32.mrb[0].mxu0
    %v2373 = vadd.f32 %v2228, %v2372
    %v2374 = vpop.f32.mrb[0].mxu0
    %2375 = vmatprep.mubr.f32.mxu0 %v2020
    %2376 = vmatmul.mubr.f32.gmra.mrb[0].mxu0 %v2019
    %v2377 = vpop.f32.mrb[0].mxu0
    %v2378 = vadd.f32 %v2233, %v2377
    %v2379 = vpop.f32.mrb[0].mxu0
    %2380 = vmatprep.mubr.f32.mxu0 %v2024
    %2381 = vmatmul.mubr.f32.gmra.mrb[0].mxu0 %v2023
    %v2382 = vpop.f32.mrb[0].mxu0
    %v2383 = vadd.f32 %v2238, %v2382
    %v2384 = vpop.f32.mrb[0].mxu0
    %2385 = vdwg.mxu0
    %v2386 = vadd.f32 %v2308, %v1059
    %v2387 = vadd.f32 %v2313, %v1060
    %v2388 = vadd.f32 %v2318, %v1061
    %v2389 = vadd.f32 %v2323, %v1062
    %v2390 = vadd.f32 %v2328, %v1063
    %v2391 = vadd.f32 %v2333, %v1064
    %v2392 = vadd.f32 %v2338, %v1065
    %v2393 = vadd.f32 %v2343, %v1066
    %v2394 = vadd.f32 %v2348, %v1067
    %v2395 = vadd.f32 %v2353, %v1068
    %v2396 = vadd.f32 %v2358, %v1069
    %v2397 = vadd.f32 %v2363, %v1070
    %v2398 = vadd.f32 %v2368, %v1071
    %v2399 = vadd.f32 %v2373, %v1072
    %v2400 = vadd.f32 %v2378, %v1073
    %v2401 = vadd.f32 %v2383, %v1074
    %2402 = vst [vmem:[#allocation11] sm:$0xff] %v2386
    %2403 = vst [vmem:[#allocation11 + $0x8] sm:$0xff] %v2387
    %2404 = vst [vmem:[#allocation11 + $0x10] sm:$0xff] %v2388
    %2405 = vst [vmem:[#allocation11 + $0x18] sm:$0xff] %v2389
    %2406 = vst [vmem:[#allocation11 + $0x20] sm:$0xff] %v2390
    %2407 = vst [vmem:[#allocation11 + $0x28] sm:$0xff] %v2391
    %2408 = vst [vmem:[#allocation11 + $0x30] sm:$0xff] %v2392
    %2409 = vst [vmem:[#allocation11 + $0x38] sm:$0xff] %v2393
    %2410 = vst [vmem:[#allocation11 + $0x40] sm:$0xff] %v2394
    %2411 = vst [vmem:[#allocation11 + $0x48] sm:$0xff] %v2395
    %2412 = vst [vmem:[#allocation11 + $0x50] sm:$0xff] %v2396
    %2413 = vst [vmem:[#allocation11 + $0x58] sm:$0xff] %v2397
    %2414 = vst [vmem:[#allocation11 + $0x60] sm:$0xff] %v2398
    %2415 = vst [vmem:[#allocation11 + $0x68] sm:$0xff] %v2399
    %2416 = vst [vmem:[#allocation11 + $0x70] sm:$0xff] %v2400
    %2417 = vst [vmem:[#allocation11 + $0x78] sm:$0xff] %v2401
    // Predicated region
    $region66: #{tpu_custom_call.1} parent=1 // pred_check
      _
    $region67: #{tpu_custom_call.1} parent=1 // pred_check_branch
      %2419 = sbr.rel (0) target = $region69
    $region68: #{tpu_custom_call.1} parent=1 // pred_region
      %s2421 = ssub.s32 2048, 2048
      %2422 = vsyncadd [#allocation4], %s2421
      %s2423 = sshll.u32 [#allocation11], 4
      %s2424 = int_to_ptr.vmem [resolvable:$true] %s2423
      %2429 = dma.vmem_to_hbm [thread:$0]  %s2424, 2048, %s11, [#allocation4], 128, 128, 8
    $region69: #{tpu_custom_call.1} parent=1 // pred_fallthru
      _
    // Predicated region
    $region70: #{tpu_custom_call.1} parent=1 // pred_check
      _
    $region71: #{tpu_custom_call.1} parent=1 // pred_check_branch
      %2431 = sbr.rel (0) target = $region73
    $region72: #{tpu_custom_call.1} parent=1 // pred_region
      %2432 = dma.done [#allocation4], 2048
    $region73: #{tpu_custom_call.1} parent=1 // pred_fallthru
      _
    %2433 = vsyncpa [#allocation3], 1
    %2434 = vsyncpa [#allocation6], 1
    %2435 = vsyncpa [#allocation9], 1
    %2436 = vsyncpa [#allocation4], 1

</llo_original>
